<compile_context>
chip_gen: v6e
topology: v6e:2x2x1
jax: 0.10.0
libtpu: 0.0.40
codegen_flags: <defaults>
</compile_context>

<pallas_src>
import functools

import jax
import jax.numpy as jnp
from jax import lax
from jax.experimental import pallas as pl
from jax.experimental.pallas import tpu as pltpu


def _hwd_kernel(x_ref, w_ref, b_ref, o_ref, *, oc, width, half_width, rows):
    # x_ref: (1, C, 2*rows*width)   raw NCHW rows, lanes flattened as (input_row, col)
    # w_ref: (2*OC, 2*C)            folded Haar + 1x1-conv + BN-scale weights (f32)
    # b_ref: (OC, 1)                folded bias (f32)
    # o_ref: (1, OC, rows*half_width)  NCHW-flattened output tile (lane-dense)
    wm = w_ref[...]
    b = b_ref[...]
    # 0/1 even-lane selection matrix: sel[p, j] = (p == 2j).  Column compaction is done
    # on the MXU (huge slack in this HBM-bound op); built in-kernel from iota (tiny).
    sel = (lax.broadcasted_iota(jnp.int32, (width, half_width), 0)
           == 2 * lax.broadcasted_iota(jnp.int32, (width, half_width), 1)
           ).astype(jnp.float32)

    for i in range(rows):  # static unroll; bounded by the tile chooser
        # One input row pair: even row -> a/b pixels, odd row -> c/d pixels.
        xe = x_ref[0, :, (2 * i) * width:(2 * i + 1) * width].astype(jnp.float32)
        xo = x_ref[0, :, (2 * i + 1) * width:(2 * i + 2) * width].astype(jnp.float32)
        xeo = jnp.concatenate([xe, xo], axis=0)                   # (2C, W)
        z = jnp.dot(wm, xeo, preferred_element_type=jnp.float32)  # (2OC, W)
        z0 = z[:oc]                    # even-column projection (wa|wc)
        z1 = z[oc:]                    # odd-column projection  (wb|wd)
        z1 = jnp.concatenate([z1[:, 1:], z1[:, :1]], axis=1)      # z1[:, k] <- z1[:, k+1]
        s = z0 + z1                                               # valid at even lanes
        row = jnp.dot(s, sel, preferred_element_type=jnp.float32)  # (OC, W/2) compaction
        row = jnp.maximum(row + b, 0.0)
        o_ref[0, :, i * half_width:(i + 1) * half_width] = row.astype(o_ref.dtype)


def _choose_rows(h2, w2, row_bytes, fixed_bytes, budget, max_rows=32, min_tiles=4):
    """Output rows per grid step: divides H/2, keeps HBM-side blocks lane-dense
    (multiple of 128 lanes or full extent), fits the VMEM budget, and prefers the
    largest tile that still leaves >= min_tiles spatial grid steps."""
    valid = []
    for r in range(1, h2 + 1):
        if h2 % r:
            continue
        if r != h2 and (r * w2) % 128:
            continue            # lane-dense output blocks; also satisfies the x block
        if r > max_rows and r != h2:
            continue            # bound the unrolled in-kernel row loop
        valid.append(r)
    fit = [r for r in valid if fixed_bytes + r * row_bytes <= budget]
    if not fit:
        return min(valid)
    pref = [r for r in fit if h2 // r >= min_tiles]
    return max(pref) if pref else max(fit)


def hwd_forward(x_nchw, w_io, conv_bias, bn_gamma, bn_beta, bn_mean, bn_var, eps=1e-5):
    # TODO(synk): BatchNorm2d is folded in eval mode (running stats); training-mode
    # batch statistics are not computed here.
    N, C, H, W = x_nchw.shape
    assert H % 2 == 0 and W % 2 == 0, "haar J=1 zero-mode path assumes even H, W"
    H2, W2 = H // 2, W // 2
    P = H2 * W2
    OC = w_io.shape[1]
    dtype = x_nchw.dtype
    f32 = jnp.float32

    # ---- fold Haar butterfly + 1x1 conv + BN affine into one weight/bias (tiny, XLA) ----
    w_io = w_io.astype(f32)
    w0, w1, w2, w3 = (w_io[k * C:(k + 1) * C] for k in range(4))
    scale = (bn_gamma.astype(f32) / jnp.sqrt(bn_var.astype(f32) + eps))
    wa = 0.5 * (w0 + w1 + w2 + w3) * scale   # coeff of x[2i,   2j  ]
    wb = 0.5 * (w0 + w1 - w2 - w3) * scale   # coeff of x[2i,   2j+1]
    wc = 0.5 * (w0 - w1 + w2 - w3) * scale   # coeff of x[2i+1, 2j  ]
    wd = 0.5 * (w0 - w1 - w2 + w3) * scale   # coeff of x[2i+1, 2j+1]
    # Kernel weights stay float32 (no activation-dtype downcast of conv+BN weights).
    w_main = jnp.concatenate(
        [jnp.concatenate([wa.T, wc.T], axis=1),    # rows [0:OC):  even-column projection
         jnp.concatenate([wb.T, wd.T], axis=1)],   # rows [OC:2OC): odd-column projection
        axis=0)                                    # (2*OC, 2*C), f32
    shift = bn_beta.astype(f32) - bn_mean.astype(f32) * scale
    b_main = (conv_bias.astype(f32) * scale + shift).reshape(OC, 1)

    # ---- free view only: kernel reads the raw NCHW tensor exactly once ----
    x_flat = x_nchw.reshape(N, C, H * W)

    # ---- generation-aware VMEM budget (double-buffered blocks + x2 weight buffers) ----
    try:
        phys_vmem = int(pltpu.get_tpu_info().vmem_capacity_bytes)
    except Exception:
        phys_vmem = 64 * 1024 * 1024
    vmem_limit = min(32 * 1024 * 1024, phys_vmem // 2)
    budget = (vmem_limit * 3) // 4
    itemsize = jnp.dtype(dtype).itemsize
    row_bytes = 2 * (C * 2 * W * itemsize + OC * W2 * itemsize)          # x2: double buffer
    fixed_bytes = 2 * (w_main.size + b_main.size) * 4 + 2 * 1024 * 1024  # weights + slack
    rows = _choose_rows(H2, W2, row_bytes, fixed_bytes, budget)
    grid = (N, H2 // rows)

    kernel = functools.partial(_hwd_kernel, oc=OC, width=W, half_width=W2, rows=rows)

    out_flat = pl.pallas_call(
        kernel,
        out_shape=jax.ShapeDtypeStruct((N, OC, P), dtype),
        grid_spec=pltpu.PrefetchScalarGridSpec(
            num_scalar_prefetch=0,
            grid=grid,
            in_specs=[
                pl.BlockSpec((1, C, 2 * rows * W), lambda n, t: (n, 0, t)),
                # TODO(synk): try pipeline_mode=pl.Buffered(1) on the constant weight /
                # bias blocks and pl.Buffered(3) on x once verified on all generations.
                pl.BlockSpec((2 * OC, 2 * C), lambda n, t: (0, 0)),
                pl.BlockSpec((OC, 1), lambda n, t: (0, 0)),
            ],
            out_specs=pl.BlockSpec((1, OC, rows * W2), lambda n, t: (n, 0, t)),
        ),
        compiler_params=pltpu.CompilerParams(
            dimension_semantics=("parallel", "parallel"),
            vmem_limit_bytes=vmem_limit),
    )(x_flat, w_main, b_main)

    return out_flat.reshape(N, OC, H2, W2)          # already NCHW — no transpose


def hwd_reference(x, w_io, conv_bias, gamma, beta, mean, var, eps=1e-5):
    # Independent pure-JAX reference (NCHW, mirrors the PyTorch module in eval mode).
    a = x[:, :, 0::2, 0::2]
    b = x[:, :, 0::2, 1::2]
    c = x[:, :, 1::2, 0::2]
    d = x[:, :, 1::2, 1::2]
    ll = (a + b + c + d) * 0.5
    s1 = (a + b - c - d) * 0.5
    s2 = (a - b + c - d) * 0.5
    s3 = (a - b - c + d) * 0.5
    feat = jnp.concatenate([ll, s1, s2, s3], axis=1)            # (N, 4C, H2, W2)
    z = jnp.einsum('nchw,co->nohw', feat, w_io) + conv_bias[None, :, None, None]
    sc = gamma / jnp.sqrt(var + eps)
    sh = beta - mean * sc
    return jnp.maximum(z * sc[None, :, None, None] + sh[None, :, None, None], 0.0)


if __name__ == "__main__":
    key = jax.random.PRNGKey(0)
    kx, kw, kb, kg, kbe, km, kv = jax.random.split(key, 7)

    N, C, H, W = 2, 4, 16, 16          # in_ch = 4
    OC = 8                             # out_ch = 8

    x = jax.random.normal(kx, (N, C, H, W), jnp.float32)
    w_io = 0.1 * jax.random.normal(kw, (4 * C, OC), jnp.float32)   # conv weight (in, out)
    conv_bias = 0.1 * jax.random.normal(kb, (OC,), jnp.float32)
    bn_gamma = 1.0 + 0.1 * jax.random.normal(kg, (OC,), jnp.float32)
    bn_beta = 0.1 * jax.random.normal(kbe, (OC,), jnp.float32)
    bn_mean = 0.1 * jax.random.normal(km, (OC,), jnp.float32)
    bn_var = jnp.abs(jax.random.normal(kv, (OC,), jnp.float32)) + 0.5

    out = jax.block_until_ready(
        hwd_forward(x, w_io, conv_bias, bn_gamma, bn_beta, bn_mean, bn_var))
    ref = hwd_reference(x, w_io, conv_bias, bn_gamma, bn_beta, bn_mean, bn_var)

    assert out.shape == (N, OC, H // 2, W // 2), out.shape
    err = float(jnp.max(jnp.abs(out - ref)))
    assert jnp.allclose(out, ref, atol=1e-3, rtol=1e-3), err
    print("KERNEL_OK")
</pallas_src>

<mosaic_0001>
module attributes {stable_mosaic.version = 11 : i64} {
  func.func @_hwd_kernel(%arg0: i32, %arg1: i32, %arg2: memref<1x4x256xf32, #tpu.memory_space<vmem>>, %arg3: memref<16x8xf32, #tpu.memory_space<vmem>>, %arg4: memref<8x1xf32, #tpu.memory_space<vmem>>, %arg5: memref<1x8x64xf32, #tpu.memory_space<vmem>>) attributes {dimension_semantics = [#tpu.dimension_semantics<parallel>, #tpu.dimension_semantics<parallel>], iteration_bounds = array<i64: 2, 1>, scalar_prefetch = 0 : i64, scratch_operands = 0 : i64, tpu.core_type = #tpu.core_type<tc>, window_params = [{transform_indices = @transform_0, window_bounds = array<i64: 1, 4, 256>}, {pipeline_mode = #tpu.pipeline_mode<synchronous>, transform_indices = @transform_1, window_bounds = array<i64: 16, 8>}, {pipeline_mode = #tpu.pipeline_mode<synchronous>, transform_indices = @transform_2, window_bounds = array<i64: 8, 1>}, {transform_indices = @transform_3, window_bounds = array<i64: 1, 8, 64>}]} {
    %c0 = arith.constant 0 : index
    %c0_0 = arith.constant 0 : index
    %0 = vector.load %arg3[%c0, %c0_0] : memref<16x8xf32, #tpu.memory_space<vmem>>, vector<16x8xf32>
    %c0_1 = arith.constant 0 : index
    %c0_2 = arith.constant 0 : index
    %1 = vector.load %arg4[%c0_1, %c0_2] : memref<8x1xf32, #tpu.memory_space<vmem>>, vector<8x1xf32>
    %2 = tpu.iota {dimensions = array<i32: 0>} : vector<16x8xi32>
    %3 = tpu.iota {dimensions = array<i32: 1>} : vector<16x8xi32>
    %c2_i32 = arith.constant 2 : i32
    %4 = vector.broadcast %c2_i32 : i32 to vector<16x8xi32>
    %5 = arith.muli %4, %3 : vector<16x8xi32>
    %6 = arith.cmpi eq, %2, %5 : vector<16x8xi32>
    %7 = arith.extui %6 : vector<16x8xi1> to vector<16x8xi32>
    %8 = arith.sitofp %7 : vector<16x8xi32> to vector<16x8xf32>
    %c0_3 = arith.constant 0 : index
    %c0_4 = arith.constant 0 : index
    %c0_5 = arith.constant 0 : index
    %9 = vector.load %arg2[%c0_3, %c0_4, %c0_5] : memref<1x4x256xf32, #tpu.memory_space<vmem>>, vector<1x4x16xf32>
    %10 = vector.shape_cast %9 : vector<1x4x16xf32> to vector<4x16xf32>
    %c0_6 = arith.constant 0 : index
    %c0_7 = arith.constant 0 : index
    %c16 = arith.constant 16 : index
    %11 = vector.load %arg2[%c0_6, %c0_7, %c16] : memref<1x4x256xf32, #tpu.memory_space<vmem>>, vector<1x4x16xf32>
    %12 = vector.shape_cast %11 : vector<1x4x16xf32> to vector<4x16xf32>
    %13 = tpu.concatenate %10, %12 in 0 : vector<4x16xf32>, vector<4x16xf32> -> vector<8x16xf32>
    %cst = arith.constant dense<0.000000e+00> : vector<16x16xf32>
    %14 = tpu.matmul %0, %13, %cst {dimension_numbers = #tpu.dot_dimension_numbers<[1], [0], [0], [1], [0, 0, 1, 1], [], []>} : vector<16x8xf32>, vector<8x16xf32>, vector<16x16xf32> -> vector<16x16xf32>
    %15 = vector.extract_strided_slice %14 {offsets = [0, 0], sizes = [8, 16], strides = [1, 1]} : vector<16x16xf32> to vector<8x16xf32>
    %16 = vector.extract_strided_slice %14 {offsets = [8, 0], sizes = [8, 16], strides = [1, 1]} : vector<16x16xf32> to vector<8x16xf32>
    %17 = vector.extract_strided_slice %16 {offsets = [0, 1], sizes = [8, 15], strides = [1, 1]} : vector<8x16xf32> to vector<8x15xf32>
    %18 = vector.extract_strided_slice %16 {offsets = [0, 0], sizes = [8, 1], strides = [1, 1]} : vector<8x16xf32> to vector<8x1xf32>
    %19 = tpu.concatenate %17, %18 in 1 : vector<8x15xf32>, vector<8x1xf32> -> vector<8x16xf32>
    %20 = arith.addf %15, %19 : vector<8x16xf32>
    %cst_8 = arith.constant dense<0.000000e+00> : vector<8x8xf32>
    %21 = tpu.matmul %20, %8, %cst_8 {dimension_numbers = #tpu.dot_dimension_numbers<[1], [0], [0], [1], [0, 0, 1, 1], [], []>} : vector<8x16xf32>, vector<16x8xf32>, vector<8x8xf32> -> vector<8x8xf32>
    %22 = vector.broadcast %1 : vector<8x1xf32> to vector<8x8xf32>
    %23 = arith.addf %21, %22 : vector<8x8xf32>
    %cst_9 = arith.constant 0.000000e+00 : f32
    %24 = vector.broadcast %cst_9 : f32 to vector<8x8xf32>
    %25 = arith.maximumf %23, %24 : vector<8x8xf32>
    %c0_10 = arith.constant 0 : index
    %c0_11 = arith.constant 0 : index
    %c0_12 = arith.constant 0 : index
    %26 = vector.load %arg5[%c0_10, %c0_11, %c0_12] : memref<1x8x64xf32, #tpu.memory_space<vmem>>, vector<1x8x8xf32>
    %27 = vector.shape_cast %26 : vector<1x8x8xf32> to vector<8x8xf32>
    %28 = vector.shape_cast %25 : vector<8x8xf32> to vector<1x8x8xf32>
    tpu.vector_store %arg5[%c0_10, %c0_11, %c0_12], %28 {strides = array<i32>} : memref<1x8x64xf32, #tpu.memory_space<vmem>>, vector<1x8x8xf32>,
    %c0_13 = arith.constant 0 : index
    %c0_14 = arith.constant 0 : index
    %c32 = arith.constant 32 : index
    %29 = vector.load %arg2[%c0_13, %c0_14, %c32] : memref<1x4x256xf32, #tpu.memory_space<vmem>>, vector<1x4x16xf32>
    %30 = vector.shape_cast %29 : vector<1x4x16xf32> to vector<4x16xf32>
    %c0_15 = arith.constant 0 : index
    %c0_16 = arith.constant 0 : index
    %c48 = arith.constant 48 : index
    %31 = vector.load %arg2[%c0_15, %c0_16, %c48] : memref<1x4x256xf32, #tpu.memory_space<vmem>>, vector<1x4x16xf32>
    %32 = vector.shape_cast %31 : vector<1x4x16xf32> to vector<4x16xf32>
    %33 = tpu.concatenate %30, %32 in 0 : vector<4x16xf32>, vector<4x16xf32> -> vector<8x16xf32>
    %cst_17 = arith.constant dense<0.000000e+00> : vector<16x16xf32>
    %34 = tpu.matmul %0, %33, %cst_17 {dimension_numbers = #tpu.dot_dimension_numbers<[1], [0], [0], [1], [0, 0, 1, 1], [], []>} : vector<16x8xf32>, vector<8x16xf32>, vector<16x16xf32> -> vector<16x16xf32>
    %35 = vector.extract_strided_slice %34 {offsets = [0, 0], sizes = [8, 16], strides = [1, 1]} : vector<16x16xf32> to vector<8x16xf32>
    %36 = vector.extract_strided_slice %34 {offsets = [8, 0], sizes = [8, 16], strides = [1, 1]} : vector<16x16xf32> to vector<8x16xf32>
    %37 = vector.extract_strided_slice %36 {offsets = [0, 1], sizes = [8, 15], strides = [1, 1]} : vector<8x16xf32> to vector<8x15xf32>
    %38 = vector.extract_strided_slice %36 {offsets = [0, 0], sizes = [8, 1], strides = [1, 1]} : vector<8x16xf32> to vector<8x1xf32>
    %39 = tpu.concatenate %37, %38 in 1 : vector<8x15xf32>, vector<8x1xf32> -> vector<8x16xf32>
    %40 = arith.addf %35, %39 : vector<8x16xf32>
    %cst_18 = arith.constant dense<0.000000e+00> : vector<8x8xf32>
    %41 = tpu.matmul %40, %8, %cst_18 {dimension_numbers = #tpu.dot_dimension_numbers<[1], [0], [0], [1], [0, 0, 1, 1], [], []>} : vector<8x16xf32>, vector<16x8xf32>, vector<8x8xf32> -> vector<8x8xf32>
    %42 = vector.broadcast %1 : vector<8x1xf32> to vector<8x8xf32>
    %43 = arith.addf %41, %42 : vector<8x8xf32>
    %cst_19 = arith.constant 0.000000e+00 : f32
    %44 = vector.broadcast %cst_19 : f32 to vector<8x8xf32>
    %45 = arith.maximumf %43, %44 : vector<8x8xf32>
    %c0_20 = arith.constant 0 : index
    %c0_21 = arith.constant 0 : index
    %c8 = arith.constant 8 : index
    %46 = vector.load %arg5[%c0_20, %c0_21, %c8] : memref<1x8x64xf32, #tpu.memory_space<vmem>>, vector<1x8x8xf32>
    %47 = vector.shape_cast %46 : vector<1x8x8xf32> to vector<8x8xf32>
    %48 = vector.shape_cast %45 : vector<8x8xf32> to vector<1x8x8xf32>
    tpu.vector_store %arg5[%c0_20, %c0_21, %c8], %48 {strides = array<i32>} : memref<1x8x64xf32, #tpu.memory_space<vmem>>, vector<1x8x8xf32>,
    %c0_22 = arith.constant 0 : index
    %c0_23 = arith.constant 0 : index
    %c64 = arith.constant 64 : index
    %49 = vector.load %arg2[%c0_22, %c0_23, %c64] : memref<1x4x256xf32, #tpu.memory_space<vmem>>, vector<1x4x16xf32>
    %50 = vector.shape_cast %49 : vector<1x4x16xf32> to vector<4x16xf32>
    %c0_24 = arith.constant 0 : index
    %c0_25 = arith.constant 0 : index
    %c80 = arith.constant 80 : index
    %51 = vector.load %arg2[%c0_24, %c0_25, %c80] : memref<1x4x256xf32, #tpu.memory_space<vmem>>, vector<1x4x16xf32>
    %52 = vector.shape_cast %51 : vector<1x4x16xf32> to vector<4x16xf32>
    %53 = tpu.concatenate %50, %52 in 0 : vector<4x16xf32>, vector<4x16xf32> -> vector<8x16xf32>
    %cst_26 = arith.constant dense<0.000000e+00> : vector<16x16xf32>
    %54 = tpu.matmul %0, %53, %cst_26 {dimension_numbers = #tpu.dot_dimension_numbers<[1], [0], [0], [1], [0, 0, 1, 1], [], []>} : vector<16x8xf32>, vector<8x16xf32>, vector<16x16xf32> -> vector<16x16xf32>
    %55 = vector.extract_strided_slice %54 {offsets = [0, 0], sizes = [8, 16], strides = [1, 1]} : vector<16x16xf32> to vector<8x16xf32>
    %56 = vector.extract_strided_slice %54 {offsets = [8, 0], sizes = [8, 16], strides = [1, 1]} : vector<16x16xf32> to vector<8x16xf32>
    %57 = vector.extract_strided_slice %56 {offsets = [0, 1], sizes = [8, 15], strides = [1, 1]} : vector<8x16xf32> to vector<8x15xf32>
    %58 = vector.extract_strided_slice %56 {offsets = [0, 0], sizes = [8, 1], strides = [1, 1]} : vector<8x16xf32> to vector<8x1xf32>
    %59 = tpu.concatenate %57, %58 in 1 : vector<8x15xf32>, vector<8x1xf32> -> vector<8x16xf32>
    %60 = arith.addf %55, %59 : vector<8x16xf32>
    %cst_27 = arith.constant dense<0.000000e+00> : vector<8x8xf32>
    %61 = tpu.matmul %60, %8, %cst_27 {dimension_numbers = #tpu.dot_dimension_numbers<[1], [0], [0], [1], [0, 0, 1, 1], [], []>} : vector<8x16xf32>, vector<16x8xf32>, vector<8x8xf32> -> vector<8x8xf32>
    %62 = vector.broadcast %1 : vector<8x1xf32> to vector<8x8xf32>
    %63 = arith.addf %61, %62 : vector<8x8xf32>
    %cst_28 = arith.constant 0.000000e+00 : f32
    %64 = vector.broadcast %cst_28 : f32 to vector<8x8xf32>
    %65 = arith.maximumf %63, %64 : vector<8x8xf32>
    %c0_29 = arith.constant 0 : index
    %c0_30 = arith.constant 0 : index
    %c16_31 = arith.constant 16 : index
    %66 = vector.load %arg5[%c0_29, %c0_30, %c16_31] : memref<1x8x64xf32, #tpu.memory_space<vmem>>, vector<1x8x8xf32>
    %67 = vector.shape_cast %66 : vector<1x8x8xf32> to vector<8x8xf32>
    %68 = vector.shape_cast %65 : vector<8x8xf32> to vector<1x8x8xf32>
    tpu.vector_store %arg5[%c0_29, %c0_30, %c16_31], %68 {strides = array<i32>} : memref<1x8x64xf32, #tpu.memory_space<vmem>>, vector<1x8x8xf32>,
    %c0_32 = arith.constant 0 : index
    %c0_33 = arith.constant 0 : index
    %c96 = arith.constant 96 : index
    %69 = vector.load %arg2[%c0_32, %c0_33, %c96] : memref<1x4x256xf32, #tpu.memory_space<vmem>>, vector<1x4x16xf32>
    %70 = vector.shape_cast %69 : vector<1x4x16xf32> to vector<4x16xf32>
    %c0_34 = arith.constant 0 : index
    %c0_35 = arith.constant 0 : index
    %c112 = arith.constant 112 : index
    %71 = vector.load %arg2[%c0_34, %c0_35, %c112] : memref<1x4x256xf32, #tpu.memory_space<vmem>>, vector<1x4x16xf32>
    %72 = vector.shape_cast %71 : vector<1x4x16xf32> to vector<4x16xf32>
    %73 = tpu.concatenate %70, %72 in 0 : vector<4x16xf32>, vector<4x16xf32> -> vector<8x16xf32>
    %cst_36 = arith.constant dense<0.000000e+00> : vector<16x16xf32>
    %74 = tpu.matmul %0, %73, %cst_36 {dimension_numbers = #tpu.dot_dimension_numbers<[1], [0], [0], [1], [0, 0, 1, 1], [], []>} : vector<16x8xf32>, vector<8x16xf32>, vector<16x16xf32> -> vector<16x16xf32>
    %75 = vector.extract_strided_slice %74 {offsets = [0, 0], sizes = [8, 16], strides = [1, 1]} : vector<16x16xf32> to vector<8x16xf32>
    %76 = vector.extract_strided_slice %74 {offsets = [8, 0], sizes = [8, 16], strides = [1, 1]} : vector<16x16xf32> to vector<8x16xf32>
    %77 = vector.extract_strided_slice %76 {offsets = [0, 1], sizes = [8, 15], strides = [1, 1]} : vector<8x16xf32> to vector<8x15xf32>
    %78 = vector.extract_strided_slice %76 {offsets = [0, 0], sizes = [8, 1], strides = [1, 1]} : vector<8x16xf32> to vector<8x1xf32>
    %79 = tpu.concatenate %77, %78 in 1 : vector<8x15xf32>, vector<8x1xf32> -> vector<8x16xf32>
    %80 = arith.addf %75, %79 : vector<8x16xf32>
    %cst_37 = arith.constant dense<0.000000e+00> : vector<8x8xf32>
    %81 = tpu.matmul %80, %8, %cst_37 {dimension_numbers = #tpu.dot_dimension_numbers<[1], [0], [0], [1], [0, 0, 1, 1], [], []>} : vector<8x16xf32>, vector<16x8xf32>, vector<8x8xf32> -> vector<8x8xf32>
    %82 = vector.broadcast %1 : vector<8x1xf32> to vector<8x8xf32>
    %83 = arith.addf %81, %82 : vector<8x8xf32>
    %cst_38 = arith.constant 0.000000e+00 : f32
    %84 = vector.broadcast %cst_38 : f32 to vector<8x8xf32>
    %85 = arith.maximumf %83, %84 : vector<8x8xf32>
    %c0_39 = arith.constant 0 : index
    %c0_40 = arith.constant 0 : index
    %c24 = arith.constant 24 : index
    %86 = vector.load %arg5[%c0_39, %c0_40, %c24] : memref<1x8x64xf32, #tpu.memory_space<vmem>>, vector<1x8x8xf32>
    %87 = vector.shape_cast %86 : vector<1x8x8xf32> to vector<8x8xf32>
    %88 = vector.shape_cast %85 : vector<8x8xf32> to vector<1x8x8xf32>
    tpu.vector_store %arg5[%c0_39, %c0_40, %c24], %88 {strides = array<i32>} : memref<1x8x64xf32, #tpu.memory_space<vmem>>, vector<1x8x8xf32>,
    %c0_41 = arith.constant 0 : index
    %c0_42 = arith.constant 0 : index
    %c128 = arith.constant 128 : index
    %89 = vector.load %arg2[%c0_41, %c0_42, %c128] : memref<1x4x256xf32, #tpu.memory_space<vmem>>, vector<1x4x16xf32>
    %90 = vector.shape_cast %89 : vector<1x4x16xf32> to vector<4x16xf32>
    %c0_43 = arith.constant 0 : index
    %c0_44 = arith.constant 0 : index
    %c144 = arith.constant 144 : index
    %91 = vector.load %arg2[%c0_43, %c0_44, %c144] : memref<1x4x256xf32, #tpu.memory_space<vmem>>, vector<1x4x16xf32>
    %92 = vector.shape_cast %91 : vector<1x4x16xf32> to vector<4x16xf32>
    %93 = tpu.concatenate %90, %92 in 0 : vector<4x16xf32>, vector<4x16xf32> -> vector<8x16xf32>
    %cst_45 = arith.constant dense<0.000000e+00> : vector<16x16xf32>
    %94 = tpu.matmul %0, %93, %cst_45 {dimension_numbers = #tpu.dot_dimension_numbers<[1], [0], [0], [1], [0, 0, 1, 1], [], []>} : vector<16x8xf32>, vector<8x16xf32>, vector<16x16xf32> -> vector<16x16xf32>
    %95 = vector.extract_strided_slice %94 {offsets = [0, 0], sizes = [8, 16], strides = [1, 1]} : vector<16x16xf32> to vector<8x16xf32>
    %96 = vector.extract_strided_slice %94 {offsets = [8, 0], sizes = [8, 16], strides = [1, 1]} : vector<16x16xf32> to vector<8x16xf32>
    %97 = vector.extract_strided_slice %96 {offsets = [0, 1], sizes = [8, 15], strides = [1, 1]} : vector<8x16xf32> to vector<8x15xf32>
    %98 = vector.extract_strided_slice %96 {offsets = [0, 0], sizes = [8, 1], strides = [1, 1]} : vector<8x16xf32> to vector<8x1xf32>
    %99 = tpu.concatenate %97, %98 in 1 : vector<8x15xf32>, vector<8x1xf32> -> vector<8x16xf32>
    %100 = arith.addf %95, %99 : vector<8x16xf32>
    %cst_46 = arith.constant dense<0.000000e+00> : vector<8x8xf32>
    %101 = tpu.matmul %100, %8, %cst_46 {dimension_numbers = #tpu.dot_dimension_numbers<[1], [0], [0], [1], [0, 0, 1, 1], [], []>} : vector<8x16xf32>, vector<16x8xf32>, vector<8x8xf32> -> vector<8x8xf32>
    %102 = vector.broadcast %1 : vector<8x1xf32> to vector<8x8xf32>
    %103 = arith.addf %101, %102 : vector<8x8xf32>
    %cst_47 = arith.constant 0.000000e+00 : f32
    %104 = vector.broadcast %cst_47 : f32 to vector<8x8xf32>
    %105 = arith.maximumf %103, %104 : vector<8x8xf32>
    %c0_48 = arith.constant 0 : index
    %c0_49 = arith.constant 0 : index
    %c32_50 = arith.constant 32 : index
    %106 = vector.load %arg5[%c0_48, %c0_49, %c32_50] : memref<1x8x64xf32, #tpu.memory_space<vmem>>, vector<1x8x8xf32>
    %107 = vector.shape_cast %106 : vector<1x8x8xf32> to vector<8x8xf32>
    %108 = vector.shape_cast %105 : vector<8x8xf32> to vector<1x8x8xf32>
    tpu.vector_store %arg5[%c0_48, %c0_49, %c32_50], %108 {strides = array<i32>} : memref<1x8x64xf32, #tpu.memory_space<vmem>>, vector<1x8x8xf32>,
    %c0_51 = arith.constant 0 : index
    %c0_52 = arith.constant 0 : index
    %c160 = arith.constant 160 : index
    %109 = vector.load %arg2[%c0_51, %c0_52, %c160] : memref<1x4x256xf32, #tpu.memory_space<vmem>>, vector<1x4x16xf32>
    %110 = vector.shape_cast %109 : vector<1x4x16xf32> to vector<4x16xf32>
    %c0_53 = arith.constant 0 : index
    %c0_54 = arith.constant 0 : index
    %c176 = arith.constant 176 : index
    %111 = vector.load %arg2[%c0_53, %c0_54, %c176] : memref<1x4x256xf32, #tpu.memory_space<vmem>>, vector<1x4x16xf32>
    %112 = vector.shape_cast %111 : vector<1x4x16xf32> to vector<4x16xf32>
    %113 = tpu.concatenate %110, %112 in 0 : vector<4x16xf32>, vector<4x16xf32> -> vector<8x16xf32>
    %cst_55 = arith.constant dense<0.000000e+00> : vector<16x16xf32>
    %114 = tpu.matmul %0, %113, %cst_55 {dimension_numbers = #tpu.dot_dimension_numbers<[1], [0], [0], [1], [0, 0, 1, 1], [], []>} : vector<16x8xf32>, vector<8x16xf32>, vector<16x16xf32> -> vector<16x16xf32>
    %115 = vector.extract_strided_slice %114 {offsets = [0, 0], sizes = [8, 16], strides = [1, 1]} : vector<16x16xf32> to vector<8x16xf32>
    %116 = vector.extract_strided_slice %114 {offsets = [8, 0], sizes = [8, 16], strides = [1, 1]} : vector<16x16xf32> to vector<8x16xf32>
    %117 = vector.extract_strided_slice %116 {offsets = [0, 1], sizes = [8, 15], strides = [1, 1]} : vector<8x16xf32> to vector<8x15xf32>
    %118 = vector.extract_strided_slice %116 {offsets = [0, 0], sizes = [8, 1], strides = [1, 1]} : vector<8x16xf32> to vector<8x1xf32>
    %119 = tpu.concatenate %117, %118 in 1 : vector<8x15xf32>, vector<8x1xf32> -> vector<8x16xf32>
    %120 = arith.addf %115, %119 : vector<8x16xf32>
    %cst_56 = arith.constant dense<0.000000e+00> : vector<8x8xf32>
    %121 = tpu.matmul %120, %8, %cst_56 {dimension_numbers = #tpu.dot_dimension_numbers<[1], [0], [0], [1], [0, 0, 1, 1], [], []>} : vector<8x16xf32>, vector<16x8xf32>, vector<8x8xf32> -> vector<8x8xf32>
    %122 = vector.broadcast %1 : vector<8x1xf32> to vector<8x8xf32>
    %123 = arith.addf %121, %122 : vector<8x8xf32>
    %cst_57 = arith.constant 0.000000e+00 : f32
    %124 = vector.broadcast %cst_57 : f32 to vector<8x8xf32>
    %125 = arith.maximumf %123, %124 : vector<8x8xf32>
    %c0_58 = arith.constant 0 : index
    %c0_59 = arith.constant 0 : index
    %c40 = arith.constant 40 : index
    %126 = vector.load %arg5[%c0_58, %c0_59, %c40] : memref<1x8x64xf32, #tpu.memory_space<vmem>>, vector<1x8x8xf32>
    %127 = vector.shape_cast %126 : vector<1x8x8xf32> to vector<8x8xf32>
    %128 = vector.shape_cast %125 : vector<8x8xf32> to vector<1x8x8xf32>
    tpu.vector_store %arg5[%c0_58, %c0_59, %c40], %128 {strides = array<i32>} : memref<1x8x64xf32, #tpu.memory_space<vmem>>, vector<1x8x8xf32>,
    %c0_60 = arith.constant 0 : index
    %c0_61 = arith.constant 0 : index
    %c192 = arith.constant 192 : index
    %129 = vector.load %arg2[%c0_60, %c0_61, %c192] : memref<1x4x256xf32, #tpu.memory_space<vmem>>, vector<1x4x16xf32>
    %130 = vector.shape_cast %129 : vector<1x4x16xf32> to vector<4x16xf32>
    %c0_62 = arith.constant 0 : index
    %c0_63 = arith.constant 0 : index
    %c208 = arith.constant 208 : index
    %131 = vector.load %arg2[%c0_62, %c0_63, %c208] : memref<1x4x256xf32, #tpu.memory_space<vmem>>, vector<1x4x16xf32>
    %132 = vector.shape_cast %131 : vector<1x4x16xf32> to vector<4x16xf32>
    %133 = tpu.concatenate %130, %132 in 0 : vector<4x16xf32>, vector<4x16xf32> -> vector<8x16xf32>
    %cst_64 = arith.constant dense<0.000000e+00> : vector<16x16xf32>
    %134 = tpu.matmul %0, %133, %cst_64 {dimension_numbers = #tpu.dot_dimension_numbers<[1], [0], [0], [1], [0, 0, 1, 1], [], []>} : vector<16x8xf32>, vector<8x16xf32>, vector<16x16xf32> -> vector<16x16xf32>
    %135 = vector.extract_strided_slice %134 {offsets = [0, 0], sizes = [8, 16], strides = [1, 1]} : vector<16x16xf32> to vector<8x16xf32>
    %136 = vector.extract_strided_slice %134 {offsets = [8, 0], sizes = [8, 16], strides = [1, 1]} : vector<16x16xf32> to vector<8x16xf32>
    %137 = vector.extract_strided_slice %136 {offsets = [0, 1], sizes = [8, 15], strides = [1, 1]} : vector<8x16xf32> to vector<8x15xf32>
    %138 = vector.extract_strided_slice %136 {offsets = [0, 0], sizes = [8, 1], strides = [1, 1]} : vector<8x16xf32> to vector<8x1xf32>
    %139 = tpu.concatenate %137, %138 in 1 : vector<8x15xf32>, vector<8x1xf32> -> vector<8x16xf32>
    %140 = arith.addf %135, %139 : vector<8x16xf32>
    %cst_65 = arith.constant dense<0.000000e+00> : vector<8x8xf32>
    %141 = tpu.matmul %140, %8, %cst_65 {dimension_numbers = #tpu.dot_dimension_numbers<[1], [0], [0], [1], [0, 0, 1, 1], [], []>} : vector<8x16xf32>, vector<16x8xf32>, vector<8x8xf32> -> vector<8x8xf32>
    %142 = vector.broadcast %1 : vector<8x1xf32> to vector<8x8xf32>
    %143 = arith.addf %141, %142 : vector<8x8xf32>
    %cst_66 = arith.constant 0.000000e+00 : f32
    %144 = vector.broadcast %cst_66 : f32 to vector<8x8xf32>
    %145 = arith.maximumf %143, %144 : vector<8x8xf32>
    %c0_67 = arith.constant 0 : index
    %c0_68 = arith.constant 0 : index
    %c48_69 = arith.constant 48 : index
    %146 = vector.load %arg5[%c0_67, %c0_68, %c48_69] : memref<1x8x64xf32, #tpu.memory_space<vmem>>, vector<1x8x8xf32>
    %147 = vector.shape_cast %146 : vector<1x8x8xf32> to vector<8x8xf32>
    %148 = vector.shape_cast %145 : vector<8x8xf32> to vector<1x8x8xf32>
    tpu.vector_store %arg5[%c0_67, %c0_68, %c48_69], %148 {strides = array<i32>} : memref<1x8x64xf32, #tpu.memory_space<vmem>>, vector<1x8x8xf32>,
    %c0_70 = arith.constant 0 : index
    %c0_71 = arith.constant 0 : index
    %c224 = arith.constant 224 : index
    %149 = vector.load %arg2[%c0_70, %c0_71, %c224] : memref<1x4x256xf32, #tpu.memory_space<vmem>>, vector<1x4x16xf32>
    %150 = vector.shape_cast %149 : vector<1x4x16xf32> to vector<4x16xf32>
    %c0_72 = arith.constant 0 : index
    %c0_73 = arith.constant 0 : index
    %c240 = arith.constant 240 : index
    %151 = vector.load %arg2[%c0_72, %c0_73, %c240] : memref<1x4x256xf32, #tpu.memory_space<vmem>>, vector<1x4x16xf32>
    %152 = vector.shape_cast %151 : vector<1x4x16xf32> to vector<4x16xf32>
    %153 = tpu.concatenate %150, %152 in 0 : vector<4x16xf32>, vector<4x16xf32> -> vector<8x16xf32>
    %cst_74 = arith.constant dense<0.000000e+00> : vector<16x16xf32>
    %154 = tpu.matmul %0, %153, %cst_74 {dimension_numbers = #tpu.dot_dimension_numbers<[1], [0], [0], [1], [0, 0, 1, 1], [], []>} : vector<16x8xf32>, vector<8x16xf32>, vector<16x16xf32> -> vector<16x16xf32>
    %155 = vector.extract_strided_slice %154 {offsets = [0, 0], sizes = [8, 16], strides = [1, 1]} : vector<16x16xf32> to vector<8x16xf32>
    %156 = vector.extract_strided_slice %154 {offsets = [8, 0], sizes = [8, 16], strides = [1, 1]} : vector<16x16xf32> to vector<8x16xf32>
    %157 = vector.extract_strided_slice %156 {offsets = [0, 1], sizes = [8, 15], strides = [1, 1]} : vector<8x16xf32> to vector<8x15xf32>
    %158 = vector.extract_strided_slice %156 {offsets = [0, 0], sizes = [8, 1], strides = [1, 1]} : vector<8x16xf32> to vector<8x1xf32>
    %159 = tpu.concatenate %157, %158 in 1 : vector<8x15xf32>, vector<8x1xf32> -> vector<8x16xf32>
    %160 = arith.addf %155, %159 : vector<8x16xf32>
    %cst_75 = arith.constant dense<0.000000e+00> : vector<8x8xf32>
    %161 = tpu.matmul %160, %8, %cst_75 {dimension_numbers = #tpu.dot_dimension_numbers<[1], [0], [0], [1], [0, 0, 1, 1], [], []>} : vector<8x16xf32>, vector<16x8xf32>, vector<8x8xf32> -> vector<8x8xf32>
    %162 = vector.broadcast %1 : vector<8x1xf32> to vector<8x8xf32>
    %163 = arith.addf %161, %162 : vector<8x8xf32>
    %cst_76 = arith.constant 0.000000e+00 : f32
    %164 = vector.broadcast %cst_76 : f32 to vector<8x8xf32>
    %165 = arith.maximumf %163, %164 : vector<8x8xf32>
    %c0_77 = arith.constant 0 : index
    %c0_78 = arith.constant 0 : index
    %c56 = arith.constant 56 : index
    %166 = vector.load %arg5[%c0_77, %c0_78, %c56] : memref<1x8x64xf32, #tpu.memory_space<vmem>>, vector<1x8x8xf32>
    %167 = vector.shape_cast %166 : vector<1x8x8xf32> to vector<8x8xf32>
    %168 = vector.shape_cast %165 : vector<8x8xf32> to vector<1x8x8xf32>
    tpu.vector_store %arg5[%c0_77, %c0_78, %c56], %168 {strides = array<i32>} : memref<1x8x64xf32, #tpu.memory_space<vmem>>, vector<1x8x8xf32>,
    return
  }
  func.func @transform_0(%arg0: i32, %arg1: i32) -> (i32, i32, i32) {
    %c0_i32 = arith.constant 0 : i32
    %c0_i32_0 = arith.constant 0 : i32
    return %arg0, %c0_i32, %arg1 : i32, i32, i32
  }
  func.func @transform_1(%arg0: i32, %arg1: i32) -> (i32, i32) {
    %c0_i32 = arith.constant 0 : i32
    %c0_i32_0 = arith.constant 0 : i32
    %c0_i32_1 = arith.constant 0 : i32
    return %c0_i32, %c0_i32_0 : i32, i32
  }
  func.func @transform_2(%arg0: i32, %arg1: i32) -> (i32, i32) {
    %c0_i32 = arith.constant 0 : i32
    %c0_i32_0 = arith.constant 0 : i32
    %c0_i32_1 = arith.constant 0 : i32
    return %c0_i32, %c0_i32_0 : i32, i32
  }
  func.func @transform_3(%arg0: i32, %arg1: i32) -> (i32, i32, i32) {
    %c0_i32 = arith.constant 0 : i32
    %c0_i32_0 = arith.constant 0 : i32
    return %arg0, %c0_i32, %arg1 : i32, i32, i32
  }
}

</mosaic_0001>

<llo_original>
// kernel: tpu_custom_call.1
$region0: #{tpu_custom_call.1}
  #allocation0 [shape = 'u32[]', space=smem, size = 0x4, offset = 0x4, fixed_abs, tag = 'smem constant byte address 0x4 - core index']
  #allocation1 [shape = 'u32[144,128]{1,0:T(1,128)}', space=vmem, size = 0x12000, scoped, tag = 'internal scratch']
  %s0 = inlined_call_operand.vmem [shape: f32[2,4,256], index: 0, kind: input, shape index: {}]
  %s1 = inlined_call_operand.vmem [shape: f32[16,8], index: 1, kind: input, shape index: {}]
  %s2 = inlined_call_operand.vmem [shape: f32[8,1], index: 2, kind: input, shape index: {}]
  %s3 = inlined_call_operand.hbm [shape: f32[2,8,64], index: 3, kind: output, shape index: {}]
  %s4 = sld [smem:[#allocation0]]
  $region45: #{tpu_custom_call.1} parent=0
    _
  %s6 = ssub.s32 1, %s4
  %s7 = scalar_select 0, %s6, %s4
  $region1: #{tpu_custom_call.1} parent=0
    #allocation2 [shape = 'u8[8192]{0}', space=vmem, size = 0x2000, scoped, tag = 'output window, operand 0']
    #allocation3 [shape = 's32[2]{0}', space=sflag, size = 0x8, scoped, tag = 'scoped memory for tpu_custom_call.1']
    %8 = vsyncpa [#allocation3], 0
    %s9 = scalar_lea.sflag [#allocation3], 1
    %10 = vsyncpa %s9, 0
    loop: start=0, step=1, limit=4
    $region2: #{tpu_custom_call.1} parent=1 // loop_pre_header
      _
    $region3: #{tpu_custom_call.1} parent=1 // loop_header
      %s12 = sphi 0, %s16
      %p13 = scmp.ge.s32.totalorder %s12, 4
      %s19 = sphi 0, %s31
      %s20 = sphi 0, %s27
      %s21 = sphi 0, %s19
      %s22 = sphi 0, %s20
      %s23 = sphi 0, %s21
      %s24 = sphi 0, %s22
      %s36 = sphi 0, %s38
      %s39 = sphi 0, %s36
      %s40 = sphi 0, %s39
      %s56 = sphi 0, %s40
      %s60 = sphi 0, %s60
      %s62 = sphi 0, %s60
      %s63 = sphi 0, %s62
      %s77 = sphi 0, %s63
      %s81 = sphi 0, %s81
      %s83 = sphi 0, %s81
      %s84 = sphi 0, %s83
      %s98 = sphi 0, %s84
      %s106 = sphi 0, %s108
      %s109 = sphi 0, %s106
      %s110 = sphi 0, %s109
      %s126 = sphi 0, %s110
    $region4: #{tpu_custom_call.1} parent=1 // loop_header_branch
      %15 = sbr.rel (%p13) target = $region8
    $region5: #{tpu_custom_call.1} parent=1 // loop_body
      %s17 = ssub.s32 %s12, 1
      %s18 = ssub.s32 %s12, 2
      %s25 = sadd.s32 1, %s20
      %p26 = scmp.ge.s32.totalorder %s25, 1
      %s27 = scalar_select %p26, 0, %s25
      %s28 = sadd.s32 1, %s19
      %s29 = scalar_select %p26, %s28, %s19
      %p30 = scmp.ge.s32.totalorder %s29, 2
      %s31 = scalar_select %p30, 0, %s29
      %s32 = ssub.s32 %s19, %s31
      %s33 = ssub.s32 %s20, %s27
      %s34 = sor.u32 %s32, %s33
      %p35 = scmp.eq.s32.totalorder %s34, 0
      %s37 = sadd.s32 %s36, 1
      %s38 = scalar_select %p35, %s36, %s37
      %p41 = pneg %p35
      %p42 = scmp.eq.s32.totalorder %s12, 1
      %p43 = por %p41, %p42
      %p44 = scmp.ne.s32.totalorder %s36, %s39
      %p45 = scmp.eq.s32.totalorder %s12, 0
      %p46 = por %p44, %p45
      %p47 = scmp.ne.s32.totalorder %s36, %s39
      %p48 = scmp.eq.s32.totalorder %s17, 1
      %p49 = por %p47, %p48
      %p50 = scmp.ne.s32.totalorder %s39, %s40
      %p51 = scmp.eq.s32.totalorder %s17, 0
      %p52 = por %p50, %p51
      %p53 = scmp.ne.s32.totalorder %s39, %s40
      %p54 = scmp.eq.s32.totalorder %s18, 1
      %p55 = por %p53, %p54
      %p57 = scmp.ne.s32.totalorder %s40, %s56
      %p58 = scmp.eq.s32.totalorder %s18, 0
      %p59 = por %p57, %p58
      %s61 = sadd.s32 %s60, 1
      %p64 = scmp.eq.s32.totalorder %s12, 1
      %p65 = scmp.ne.s32.totalorder %s60, %s62
      %p66 = scmp.eq.s32.totalorder %s12, 0
      %p67 = por %p65, %p66
      %p68 = scmp.ne.s32.totalorder %s60, %s62
      %p69 = scmp.eq.s32.totalorder %s17, 1
      %p70 = por %p68, %p69
      %p71 = scmp.ne.s32.totalorder %s62, %s63
      %p72 = scmp.eq.s32.totalorder %s17, 0
      %p73 = por %p71, %p72
      %p74 = scmp.ne.s32.totalorder %s62, %s63
      %p75 = scmp.eq.s32.totalorder %s18, 1
      %p76 = por %p74, %p75
      %p78 = scmp.ne.s32.totalorder %s63, %s77
      %p79 = scmp.eq.s32.totalorder %s18, 0
      %p80 = por %p78, %p79
      %s82 = sadd.s32 %s81, 1
      %p85 = scmp.eq.s32.totalorder %s12, 1
      %p86 = scmp.ne.s32.totalorder %s81, %s83
      %p87 = scmp.eq.s32.totalorder %s12, 0
      %p88 = por %p86, %p87
      %p89 = scmp.ne.s32.totalorder %s81, %s83
      %p90 = scmp.eq.s32.totalorder %s17, 1
      %p91 = por %p89, %p90
      %p92 = scmp.ne.s32.totalorder %s83, %s84
      %p93 = scmp.eq.s32.totalorder %s17, 0
      %p94 = por %p92, %p93
      %p95 = scmp.ne.s32.totalorder %s83, %s84
      %p96 = scmp.eq.s32.totalorder %s18, 1
      %p97 = por %p95, %p96
      %p99 = scmp.ne.s32.totalorder %s84, %s98
      %p100 = scmp.eq.s32.totalorder %s18, 0
      %p101 = por %p99, %p100
      %s102 = ssub.s32 %s19, %s31
      %s103 = ssub.s32 %s20, %s27
      %s104 = sor.u32 %s102, %s103
      %p105 = scmp.eq.s32.totalorder %s104, 0
      %s107 = sadd.s32 %s106, 1
      %s108 = scalar_select %p105, %s106, %s107
      %p111 = pneg %p105
      %p112 = scmp.eq.s32.totalorder %s12, 1
      %p113 = por %p111, %p112
      %p114 = scmp.ne.s32.totalorder %s106, %s109
      %p115 = scmp.eq.s32.totalorder %s12, 0
      %p116 = por %p114, %p115
      %p117 = scmp.ne.s32.totalorder %s106, %s109
      %p118 = scmp.eq.s32.totalorder %s17, 1
      %p119 = por %p117, %p118
      %p120 = scmp.ne.s32.totalorder %s109, %s110
      %p121 = scmp.eq.s32.totalorder %s17, 0
      %p122 = por %p120, %p121
      %p123 = scmp.ne.s32.totalorder %s109, %s110
      %p124 = scmp.eq.s32.totalorder %s18, 1
      %p125 = por %p123, %p124
      %p127 = scmp.ne.s32.totalorder %s110, %s126
      %p128 = scmp.eq.s32.totalorder %s18, 0
      %p129 = por %p127, %p128
      %p130 = scmp.le.s32.totalorder 1, %s12
      %p131 = scmp.lt.s32.totalorder %s12, 3
      %p132 = pnand %p130, %p131
      %p133 = pneg %p132
      // Predicated region
      $region9: #{tpu_custom_call.1} parent=5 // pred_check
        _
      $region10: #{tpu_custom_call.1} parent=5 // pred_check_branch
        %135 = sbr.rel (%p132) target = $region12
      $region11: #{tpu_custom_call.1} parent=5 // pred_region
        %s136 = ssub.s32 %s12, 1
        // Predicated region
        $region13: #{tpu_custom_call.1} parent=11 // pred_check
          %p137 = pneg %p73
        $region14: #{tpu_custom_call.1} parent=11 // pred_check_branch
          %139 = sbr.rel (%p137) target = $region16
        $region15: #{tpu_custom_call.1} parent=11 // pred_region
          _
        $region16: #{tpu_custom_call.1} parent=11 // pred_fallthru
          _
        // Predicated region
        $region17: #{tpu_custom_call.1} parent=11 // pred_check
          %p140 = pneg %p94
        $region18: #{tpu_custom_call.1} parent=11 // pred_check_branch
          %142 = sbr.rel (%p140) target = $region20
        $region19: #{tpu_custom_call.1} parent=11 // pred_region
          _
        $region20: #{tpu_custom_call.1} parent=11 // pred_fallthru
          _
      $region12: #{tpu_custom_call.1} parent=5 // pred_fallthru
        _
      %p143 = scmp.lt.s32.totalorder %s12, 2
      // Predicated region
      $region21: #{tpu_custom_call.1} parent=5 // pred_check
        %p144 = pneg %p143
      $region22: #{tpu_custom_call.1} parent=5 // pred_check_branch
        %146 = sbr.rel (%p144) target = $region24
      $region23: #{tpu_custom_call.1} parent=5 // pred_region
        // Predicated region
        $region25: #{tpu_custom_call.1} parent=23 // pred_check
          %p147 = pneg %p46
        $region26: #{tpu_custom_call.1} parent=23 // pred_check_branch
          %149 = sbr.rel (%p147) target = $region28
        $region27: #{tpu_custom_call.1} parent=23 // pred_region
          %s150 = smul.u32 2, %s20
          %p151 = scmp.lt.s32.totalorder %s19, 1
          %s152 = scalar_select %p151, %s19, 1
          %p153 = scmp.lt.s32.totalorder %s150, 1
          %s154 = scalar_select %p153, %s150, 1
          %s155 = smul.addr %s152, 2
          %s156 = sadd.s32 %s154, %s155
          %s157 = smul.addr %s156, 4
          %s158 = scalar_lea.vmem %s0, %s157
          %s159 = smul.u32 2, %s20
        $region28: #{tpu_custom_call.1} parent=23 // pred_fallthru
          _
      $region24: #{tpu_custom_call.1} parent=5 // pred_fallthru
        _
      %p160 = scmp.le.s32.totalorder 1, %s12
      %p161 = scmp.lt.s32.totalorder %s12, 3
      %p162 = pnand %p160, %p161
      %p163 = pneg %p162
      // Predicated region
      $region29: #{tpu_custom_call.1} parent=5 // pred_check
        _
      $region30: #{tpu_custom_call.1} parent=5 // pred_check_branch
        %165 = sbr.rel (%p162) target = $region32
      $region31: #{tpu_custom_call.1} parent=5 // pred_region
        %s166 = ssub.s32 %s12, 1
        %s167 = smul.u32 2, %s22
        %p168 = scmp.lt.s32.totalorder %s21, 1
        %s169 = scalar_select %p168, %s21, 1
        %p170 = scmp.lt.s32.totalorder %s167, 1
        %s171 = scalar_select %p170, %s167, 1
        %s172 = smul.addr %s169, 2
        %s173 = sadd.s32 %s171, %s172
        %s174 = smul.addr %s173, 4
        %s175 = scalar_lea.vmem %s0, %s174
        %p176 = pneg %p52
        %p177 = pneg %p49
        %p178 = pneg %p73
        %p179 = pneg %p70
        %p180 = pneg %p94
        %p181 = pneg %p91
        %p182 = pneg %p122
        %p183 = pneg %p119
        %s184 = sand.u32 %s109, 1
        %s185 = scalar_lea.sflag [#allocation3], %s184
        %s186 = sand.u32 %s109, 1
        %s187 = smul.addr %s186, 8
        %s188 = scalar_lea.vmem [#allocation2], %s187
        %s189 = smul.u32 2, %s22
        %p190 = scmp.lt.s32.totalorder %s21, 1
        %s191 = scalar_select %p190, %s21, 1
        %p192 = scmp.lt.s32.totalorder %s189, 1
        %s193 = scalar_select %p192, %s189, 1
        %s194 = smul.addr %s191, 2
        %s195 = sadd.s32 %s193, %s194
        %s196 = smul.addr %s195, 4
        %s197 = scalar_lea.vmem %s0, %s196
        %s198 = smul.u32 2, %s22
        %v199 = vld [vmem:[%s1] sm:$0xff]
        %v200 = vld [vmem:[%s1 + $0x8] sm:$0xff]
        %v201 = vld [vmem:[%s2] sm:$0xff]
        %v202 = vlaneseq
        %v203 = vshrl.u32 %v202, 7
        %v204 = vadd.s32 %v203, 8
        %v205 = vlaneseq
        %v206 = vand.u32 %v205, 127
        %v207 = vmul.u32 %v206, 2
        %vm208 = vcmp.eq.s32.totalorder %v203, %v207
        %vm209 = vcmp.eq.s32.totalorder %v204, %v207
        %v210 = vsel %vm208, 1, 0
        %v211 = vsel %vm209, 1, 0
        %v212 = vcvt.s32.f32 %v210
        %v213 = vcvt.s32.f32 %v211
        %v214 = vld [vmem:[%s197] sm:$0xf]
        %v216 = vcombine.low %v214, %v214
        %217 = vrot.lane.b32.xlu0 %v216, 112
        %v218 = vpop.permute.xlu0 %217
        %vm220 = vcmask 1043456
        %v221 = vsel %vm220, %v214, %v218
        %vm222 = vcmask 64512
        %v224 = vsel %vm222, %v199, 0
        %v227 = vsel %vm222, %v200, 0
        %229 = vmatprep.subr.mxu0 0.0
        %230 = vmatpush1.msra.mxu0 0.0
        %231 = vmatprep.subr.mxu0 0.0
        %232 = vmatpush1.msra.mxu0 0.0
        %233 = vmatprep.subr.mxu0 0.0
        %234 = vmatpush1.msra.mxu0 0.0
        %235 = vmatprep.subr.mxu0 0.0
        %236 = vmatpush1.msra.mxu0 0.0
        %237 = vmatprep.subr.mxu0 0.0
        %238 = vmatpush1.msra.mxu0 0.0
        %239 = vmatprep.subr.mxu0 0.0
        %240 = vmatpush1.msra.mxu0 0.0
        %241 = vmatprep.subr.mxu0 0.0
        %242 = vmatpush1.msra.mxu0 0.0
        %243 = vmatprep.subr.mxu0 0.0
        %244 = vmatpush1.msra.mxu0 0.0
        %245 = vmatprep.subr.mxu0 0.0
        %246 = vmatpush1.msra.mxu0 0.0
        %247 = vmatprep.subr.mxu0 0.0
        %248 = vmatpush1.msra.mxu0 0.0
        %249 = vmatprep.subr.mxu0 0.0
        %250 = vmatpush1.msra.mxu0 0.0
        %251 = vmatprep.subr.mxu0 0.0
        %252 = vmatpush1.msra.mxu0 0.0
        %253 = vmatprep.subr.mxu0 0.0
        %254 = vmatpush1.msra.mxu0 0.0
        %255 = vmatprep.subr.mxu0 0.0
        %256 = vmatpush1.msra.mxu0 0.0
        %257 = vmatprep.subr.mxu0 0.0
        %258 = vmatpush1.msra.mxu0 0.0
        %259 = vmatprep.subr.mxu0 0.0
        %260 = vmatpush1.msra.mxu0 %v221
        %261 = vmatprep.subr.mxu0 0.0
        %262 = vmatpush2.msra.mxu0 0.0
        %263 = vmatprep.subr.mxu0 0.0
        %264 = vmatpush2.msra.mxu0 0.0
        %265 = vmatprep.subr.mxu0 0.0
        %266 = vmatpush2.msra.mxu0 0.0
        %267 = vmatprep.subr.mxu0 0.0
        %268 = vmatpush2.msra.mxu0 0.0
        %269 = vmatprep.subr.mxu0 0.0
        %270 = vmatpush2.msra.mxu0 0.0
        %271 = vmatprep.subr.mxu0 0.0
        %272 = vmatpush2.msra.mxu0 0.0
        %273 = vmatprep.subr.mxu0 0.0
        %274 = vmatpush2.msra.mxu0 0.0
        %275 = vmatprep.subr.mxu0 0.0
        %276 = vmatpush2.msra.mxu0 0.0
        %277 = vmatprep.subr.mxu0 0.0
        %278 = vmatpush2.msra.mxu0 0.0
        %279 = vmatprep.subr.mxu0 0.0
        %280 = vmatpush2.msra.mxu0 0.0
        %281 = vmatprep.subr.mxu0 0.0
        %282 = vmatpush2.msra.mxu0 0.0
        %283 = vmatprep.subr.mxu0 0.0
        %284 = vmatpush2.msra.mxu0 0.0
        %285 = vmatprep.subr.mxu0 0.0
        %286 = vmatpush2.msra.mxu0 0.0
        %287 = vmatprep.subr.mxu0 0.0
        %288 = vmatpush2.msra.mxu0 0.0
        %289 = vmatprep.subr.mxu0 0.0
        %290 = vmatpush2.msra.mxu0 0.0
        %291 = vmatprep.subr.mxu0 0.0
        %292 = vmatpush2.msra.mxu0 0.0
        %293 = vmatprep.mubr.f32.mxu0 0.0
        %294 = vmatmul.mubr.f32.gmra.mxu0 %v224
        %v295 = vpop.f32.mrf.mxu0
        %v296 = vadd.f32 0.0, %v295
        %v297 = vpop.f32.mrf.mxu0
        %298 = vmatprep.mubr.f32.mxu0 0.0
        %299 = vmatmul.mubr.f32.gmra.mxu0 %v227
        %v300 = vpop.f32.mrf.mxu0
        %v301 = vadd.f32 0.0, %v300
        %v302 = vpop.f32.mrf.mxu0
        %303 = vdwg.mxu0
        %305 = vrot.lane.b32.xlu0 %v301, 127
        %v306 = vpop.permute.xlu0 %305
        %308 = vrot.lane.b32.xlu0 %v301, 15
        %v309 = vpop.permute.xlu0 %308
        %vm311 = vcmask 121856
        %v312 = vsel %vm311, %v306, %v309
        %v313 = vadd.f32 %v296, %v312
        %315 = vset.pattern.permute.xlu0 0
        %316 = vperm.xlu0 %315, %v201
        %v317 = vpop.permute.xlu0 %316
        %vm319 = vcmask 130048
        %v321 = vsel %vm319, %v313, 0
        %323 = vmatprep.subr.mxu0 0.0
        %324 = vmatpush1.msra.mxu0 0.0
        %325 = vmatprep.subr.mxu0 0.0
        %326 = vmatpush1.msra.mxu0 0.0
        %327 = vmatprep.subr.mxu0 0.0
        %328 = vmatpush1.msra.mxu0 0.0
        %329 = vmatprep.subr.mxu0 0.0
        %330 = vmatpush1.msra.mxu0 0.0
        %331 = vmatprep.subr.mxu0 0.0
        %332 = vmatpush1.msra.mxu0 0.0
        %333 = vmatprep.subr.mxu0 0.0
        %334 = vmatpush1.msra.mxu0 0.0
        %335 = vmatprep.subr.mxu0 0.0
        %336 = vmatpush1.msra.mxu0 0.0
        %337 = vmatprep.subr.mxu0 0.0
        %338 = vmatpush1.msra.mxu0 0.0
        %339 = vmatprep.subr.mxu0 0.0
        %340 = vmatpush1.msra.mxu0 0.0
        %341 = vmatprep.subr.mxu0 0.0
        %342 = vmatpush1.msra.mxu0 0.0
        %343 = vmatprep.subr.mxu0 0.0
        %344 = vmatpush1.msra.mxu0 0.0
        %345 = vmatprep.subr.mxu0 0.0
        %346 = vmatpush1.msra.mxu0 0.0
        %347 = vmatprep.subr.mxu0 0.0
        %348 = vmatpush1.msra.mxu0 0.0
        %349 = vmatprep.subr.mxu0 0.0
        %350 = vmatpush1.msra.mxu0 0.0
        %351 = vmatprep.subr.mxu0 0.0
        %352 = vmatpush1.msra.mxu0 %v213
        %353 = vmatprep.subr.mxu0 0.0
        %354 = vmatpush1.msra.mxu0 %v212
        %355 = vmatprep.subr.mxu0 0.0
        %356 = vmatpush2.msra.mxu0 0.0
        %357 = vmatprep.subr.mxu0 0.0
        %358 = vmatpush2.msra.mxu0 0.0
        %359 = vmatprep.subr.mxu0 0.0
        %360 = vmatpush2.msra.mxu0 0.0
        %361 = vmatprep.subr.mxu0 0.0
        %362 = vmatpush2.msra.mxu0 0.0
        %363 = vmatprep.subr.mxu0 0.0
        %364 = vmatpush2.msra.mxu0 0.0
        %365 = vmatprep.subr.mxu0 0.0
        %366 = vmatpush2.msra.mxu0 0.0
        %367 = vmatprep.subr.mxu0 0.0
        %368 = vmatpush2.msra.mxu0 0.0
        %369 = vmatprep.subr.mxu0 0.0
        %370 = vmatpush2.msra.mxu0 0.0
        %371 = vmatprep.subr.mxu0 0.0
        %372 = vmatpush2.msra.mxu0 0.0
        %373 = vmatprep.subr.mxu0 0.0
        %374 = vmatpush2.msra.mxu0 0.0
        %375 = vmatprep.subr.mxu0 0.0
        %376 = vmatpush2.msra.mxu0 0.0
        %377 = vmatprep.subr.mxu0 0.0
        %378 = vmatpush2.msra.mxu0 0.0
        %379 = vmatprep.subr.mxu0 0.0
        %380 = vmatpush2.msra.mxu0 0.0
        %381 = vmatprep.subr.mxu0 0.0
        %382 = vmatpush2.msra.mxu0 0.0
        %383 = vmatprep.subr.mxu0 0.0
        %384 = vmatpush2.msra.mxu0 0.0
        %385 = vmatprep.subr.mxu0 0.0
        %386 = vmatpush2.msra.mxu0 0.0
        %387 = vmatprep.mubr.f32.mxu0 0.0
        %388 = vmatmul.mubr.f32.gmra.mxu0 %v321
        %v389 = vpop.f32.mrf.mxu0
        %v390 = vadd.f32 %v317, %v389
        %v391 = vpop.f32.mrf.mxu0
        %392 = vdwg.mxu0
        %v393 = vmax.f32 %v390, 0.0
        %394 = vst.msk [vmem:[%s188] sm:$0xff] %vm222, %v393
        %v395 = vld [vmem:[%s197] sm:$0xf]
        %v397 = vcombine.low %v395, %v395
        %398 = vrot.lane.b32.xlu0 %v397, 112
        %v399 = vpop.permute.xlu0 %398
        %v401 = vsel %vm220, %v395, %v399
        %403 = vrot.lane.b32.xlu0 %v401, 96
        %v404 = vpop.permute.xlu0 %403
        %406 = vmatprep.subr.mxu0 0.0
        %407 = vmatpush1.msra.mxu0 0.0
        %408 = vmatprep.subr.mxu0 0.0
        %409 = vmatpush1.msra.mxu0 0.0
        %410 = vmatprep.subr.mxu0 0.0
        %411 = vmatpush1.msra.mxu0 0.0
        %412 = vmatprep.subr.mxu0 0.0
        %413 = vmatpush1.msra.mxu0 0.0
        %414 = vmatprep.subr.mxu0 0.0
        %415 = vmatpush1.msra.mxu0 0.0
        %416 = vmatprep.subr.mxu0 0.0
        %417 = vmatpush1.msra.mxu0 0.0
        %418 = vmatprep.subr.mxu0 0.0
        %419 = vmatpush1.msra.mxu0 0.0
        %420 = vmatprep.subr.mxu0 0.0
        %421 = vmatpush1.msra.mxu0 0.0
        %422 = vmatprep.subr.mxu0 0.0
        %423 = vmatpush1.msra.mxu0 0.0
        %424 = vmatprep.subr.mxu0 0.0
        %425 = vmatpush1.msra.mxu0 0.0
        %426 = vmatprep.subr.mxu0 0.0
        %427 = vmatpush1.msra.mxu0 0.0
        %428 = vmatprep.subr.mxu0 0.0
        %429 = vmatpush1.msra.mxu0 0.0
        %430 = vmatprep.subr.mxu0 0.0
        %431 = vmatpush1.msra.mxu0 0.0
        %432 = vmatprep.subr.mxu0 0.0
        %433 = vmatpush1.msra.mxu0 0.0
        %434 = vmatprep.subr.mxu0 0.0
        %435 = vmatpush1.msra.mxu0 0.0
        %436 = vmatprep.subr.mxu0 0.0
        %437 = vmatpush1.msra.mxu0 %v404
        %438 = vmatprep.subr.mxu0 0.0
        %439 = vmatpush2.msra.mxu0 0.0
        %440 = vmatprep.subr.mxu0 0.0
        %441 = vmatpush2.msra.mxu0 0.0
        %442 = vmatprep.subr.mxu0 0.0
        %443 = vmatpush2.msra.mxu0 0.0
        %444 = vmatprep.subr.mxu0 0.0
        %445 = vmatpush2.msra.mxu0 0.0
        %446 = vmatprep.subr.mxu0 0.0
        %447 = vmatpush2.msra.mxu0 0.0
        %448 = vmatprep.subr.mxu0 0.0
        %449 = vmatpush2.msra.mxu0 0.0
        %450 = vmatprep.subr.mxu0 0.0
        %451 = vmatpush2.msra.mxu0 0.0
        %452 = vmatprep.subr.mxu0 0.0
        %453 = vmatpush2.msra.mxu0 0.0
        %454 = vmatprep.subr.mxu0 0.0
        %455 = vmatpush2.msra.mxu0 0.0
        %456 = vmatprep.subr.mxu0 0.0
        %457 = vmatpush2.msra.mxu0 0.0
        %458 = vmatprep.subr.mxu0 0.0
        %459 = vmatpush2.msra.mxu0 0.0
        %460 = vmatprep.subr.mxu0 0.0
        %461 = vmatpush2.msra.mxu0 0.0
        %462 = vmatprep.subr.mxu0 0.0
        %463 = vmatpush2.msra.mxu0 0.0
        %464 = vmatprep.subr.mxu0 0.0
        %465 = vmatpush2.msra.mxu0 0.0
        %466 = vmatprep.subr.mxu0 0.0
        %467 = vmatpush2.msra.mxu0 0.0
        %468 = vmatprep.subr.mxu0 0.0
        %469 = vmatpush2.msra.mxu0 0.0
        %470 = vmatprep.mubr.f32.mxu0 0.0
        %471 = vmatmul.mubr.f32.gmra.mxu0 %v224
        %v472 = vpop.f32.mrf.mxu0
        %v473 = vadd.f32 0.0, %v472
        %v474 = vpop.f32.mrf.mxu0
        %475 = vmatprep.mubr.f32.mxu0 0.0
        %476 = vmatmul.mubr.f32.gmra.mxu0 %v227
        %v477 = vpop.f32.mrf.mxu0
        %v478 = vadd.f32 0.0, %v477
        %v479 = vpop.f32.mrf.mxu0
        %480 = vdwg.mxu0
        %482 = vrot.lane.b32.xlu0 %v478, 127
        %v483 = vpop.permute.xlu0 %482
        %485 = vrot.lane.b32.xlu0 %v478, 15
        %v486 = vpop.permute.xlu0 %485
        %v488 = vsel %vm311, %v483, %v486
        %v489 = vadd.f32 %v473, %v488
        %v491 = vsel %vm319, %v489, 0
        %493 = vmatprep.subr.mxu0 0.0
        %494 = vmatpush1.msra.mxu0 0.0
        %495 = vmatprep.subr.mxu0 0.0
        %496 = vmatpush1.msra.mxu0 0.0
        %497 = vmatprep.subr.mxu0 0.0
        %498 = vmatpush1.msra.mxu0 0.0
        %499 = vmatprep.subr.mxu0 0.0
        %500 = vmatpush1.msra.mxu0 0.0
        %501 = vmatprep.subr.mxu0 0.0
        %502 = vmatpush1.msra.mxu0 0.0
        %503 = vmatprep.subr.mxu0 0.0
        %504 = vmatpush1.msra.mxu0 0.0
        %505 = vmatprep.subr.mxu0 0.0
        %506 = vmatpush1.msra.mxu0 0.0
        %507 = vmatprep.subr.mxu0 0.0
        %508 = vmatpush1.msra.mxu0 0.0
        %509 = vmatprep.subr.mxu0 0.0
        %510 = vmatpush1.msra.mxu0 0.0
        %511 = vmatprep.subr.mxu0 0.0
        %512 = vmatpush1.msra.mxu0 0.0
        %513 = vmatprep.subr.mxu0 0.0
        %514 = vmatpush1.msra.mxu0 0.0
        %515 = vmatprep.subr.mxu0 0.0
        %516 = vmatpush1.msra.mxu0 0.0
        %517 = vmatprep.subr.mxu0 0.0
        %518 = vmatpush1.msra.mxu0 0.0
        %519 = vmatprep.subr.mxu0 0.0
        %520 = vmatpush1.msra.mxu0 0.0
        %521 = vmatprep.subr.mxu0 0.0
        %522 = vmatpush1.msra.mxu0 %v213
        %523 = vmatprep.subr.mxu0 0.0
        %524 = vmatpush1.msra.mxu0 %v212
        %525 = vmatprep.subr.mxu0 0.0
        %526 = vmatpush2.msra.mxu0 0.0
        %527 = vmatprep.subr.mxu0 0.0
        %528 = vmatpush2.msra.mxu0 0.0
        %529 = vmatprep.subr.mxu0 0.0
        %530 = vmatpush2.msra.mxu0 0.0
        %531 = vmatprep.subr.mxu0 0.0
        %532 = vmatpush2.msra.mxu0 0.0
        %533 = vmatprep.subr.mxu0 0.0
        %534 = vmatpush2.msra.mxu0 0.0
        %535 = vmatprep.subr.mxu0 0.0
        %536 = vmatpush2.msra.mxu0 0.0
        %537 = vmatprep.subr.mxu0 0.0
        %538 = vmatpush2.msra.mxu0 0.0
        %539 = vmatprep.subr.mxu0 0.0
        %540 = vmatpush2.msra.mxu0 0.0
        %541 = vmatprep.subr.mxu0 0.0
        %542 = vmatpush2.msra.mxu0 0.0
        %543 = vmatprep.subr.mxu0 0.0
        %544 = vmatpush2.msra.mxu0 0.0
        %545 = vmatprep.subr.mxu0 0.0
        %546 = vmatpush2.msra.mxu0 0.0
        %547 = vmatprep.subr.mxu0 0.0
        %548 = vmatpush2.msra.mxu0 0.0
        %549 = vmatprep.subr.mxu0 0.0
        %550 = vmatpush2.msra.mxu0 0.0
        %551 = vmatprep.subr.mxu0 0.0
        %552 = vmatpush2.msra.mxu0 0.0
        %553 = vmatprep.subr.mxu0 0.0
        %554 = vmatpush2.msra.mxu0 0.0
        %555 = vmatprep.subr.mxu0 0.0
        %556 = vmatpush2.msra.mxu0 0.0
        %557 = vmatprep.mubr.f32.mxu0 0.0
        %558 = vmatmul.mubr.f32.gmra.mxu0 %v491
        %v559 = vpop.f32.mrf.mxu0
        %v560 = vadd.f32 %v317, %v559
        %v561 = vpop.f32.mrf.mxu0
        %562 = vdwg.mxu0
        %v563 = vmax.f32 %v560, 0.0
        %565 = vrot.lane.b32.xlu0 %v563, 8
        %v566 = vpop.permute.xlu0 %565
        %vm568 = vcmask 130112
        %569 = vst.msk [vmem:[%s188] sm:$0xff] %vm568, %v566
        %v570 = vld [vmem:[%s197] sm:$0xf]
        %v572 = vcombine.low %v570, %v570
        %573 = vrot.lane.b32.xlu0 %v572, 112
        %v574 = vpop.permute.xlu0 %573
        %v576 = vsel %vm220, %v570, %v574
        %578 = vrot.lane.b32.xlu0 %v576, 64
        %v579 = vpop.permute.xlu0 %578
        %581 = vmatprep.subr.mxu0 0.0
        %582 = vmatpush1.msra.mxu0 0.0
        %583 = vmatprep.subr.mxu0 0.0
        %584 = vmatpush1.msra.mxu0 0.0
        %585 = vmatprep.subr.mxu0 0.0
        %586 = vmatpush1.msra.mxu0 0.0
        %587 = vmatprep.subr.mxu0 0.0
        %588 = vmatpush1.msra.mxu0 0.0
        %589 = vmatprep.subr.mxu0 0.0
        %590 = vmatpush1.msra.mxu0 0.0
        %591 = vmatprep.subr.mxu0 0.0
        %592 = vmatpush1.msra.mxu0 0.0
        %593 = vmatprep.subr.mxu0 0.0
        %594 = vmatpush1.msra.mxu0 0.0
        %595 = vmatprep.subr.mxu0 0.0
        %596 = vmatpush1.msra.mxu0 0.0
        %597 = vmatprep.subr.mxu0 0.0
        %598 = vmatpush1.msra.mxu0 0.0
        %599 = vmatprep.subr.mxu0 0.0
        %600 = vmatpush1.msra.mxu0 0.0
        %601 = vmatprep.subr.mxu0 0.0
        %602 = vmatpush1.msra.mxu0 0.0
        %603 = vmatprep.subr.mxu0 0.0
        %604 = vmatpush1.msra.mxu0 0.0
        %605 = vmatprep.subr.mxu0 0.0
        %606 = vmatpush1.msra.mxu0 0.0
        %607 = vmatprep.subr.mxu0 0.0
        %608 = vmatpush1.msra.mxu0 0.0
        %609 = vmatprep.subr.mxu0 0.0
        %610 = vmatpush1.msra.mxu0 0.0
        %611 = vmatprep.subr.mxu0 0.0
        %612 = vmatpush1.msra.mxu0 %v579
        %613 = vmatprep.subr.mxu0 0.0
        %614 = vmatpush2.msra.mxu0 0.0
        %615 = vmatprep.subr.mxu0 0.0
        %616 = vmatpush2.msra.mxu0 0.0
        %617 = vmatprep.subr.mxu0 0.0
        %618 = vmatpush2.msra.mxu0 0.0
        %619 = vmatprep.subr.mxu0 0.0
        %620 = vmatpush2.msra.mxu0 0.0
        %621 = vmatprep.subr.mxu0 0.0
        %622 = vmatpush2.msra.mxu0 0.0
        %623 = vmatprep.subr.mxu0 0.0
        %624 = vmatpush2.msra.mxu0 0.0
        %625 = vmatprep.subr.mxu0 0.0
        %626 = vmatpush2.msra.mxu0 0.0
        %627 = vmatprep.subr.mxu0 0.0
        %628 = vmatpush2.msra.mxu0 0.0
        %629 = vmatprep.subr.mxu0 0.0
        %630 = vmatpush2.msra.mxu0 0.0
        %631 = vmatprep.subr.mxu0 0.0
        %632 = vmatpush2.msra.mxu0 0.0
        %633 = vmatprep.subr.mxu0 0.0
        %634 = vmatpush2.msra.mxu0 0.0
        %635 = vmatprep.subr.mxu0 0.0
        %636 = vmatpush2.msra.mxu0 0.0
        %637 = vmatprep.subr.mxu0 0.0
        %638 = vmatpush2.msra.mxu0 0.0
        %639 = vmatprep.subr.mxu0 0.0
        %640 = vmatpush2.msra.mxu0 0.0
        %641 = vmatprep.subr.mxu0 0.0
        %642 = vmatpush2.msra.mxu0 0.0
        %643 = vmatprep.subr.mxu0 0.0
        %644 = vmatpush2.msra.mxu0 0.0
        %645 = vmatprep.mubr.f32.mxu0 0.0
        %646 = vmatmul.mubr.f32.gmra.mxu0 %v224
        %v647 = vpop.f32.mrf.mxu0
        %v648 = vadd.f32 0.0, %v647
        %v649 = vpop.f32.mrf.mxu0
        %650 = vmatprep.mubr.f32.mxu0 0.0
        %651 = vmatmul.mubr.f32.gmra.mxu0 %v227
        %v652 = vpop.f32.mrf.mxu0
        %v653 = vadd.f32 0.0, %v652
        %v654 = vpop.f32.mrf.mxu0
        %655 = vdwg.mxu0
        %657 = vrot.lane.b32.xlu0 %v653, 127
        %v658 = vpop.permute.xlu0 %657
        %660 = vrot.lane.b32.xlu0 %v653, 15
        %v661 = vpop.permute.xlu0 %660
        %v663 = vsel %vm311, %v658, %v661
        %v664 = vadd.f32 %v648, %v663
        %v666 = vsel %vm319, %v664, 0
        %668 = vmatprep.subr.mxu0 0.0
        %669 = vmatpush1.msra.mxu0 0.0
        %670 = vmatprep.subr.mxu0 0.0
        %671 = vmatpush1.msra.mxu0 0.0
        %672 = vmatprep.subr.mxu0 0.0
        %673 = vmatpush1.msra.mxu0 0.0
        %674 = vmatprep.subr.mxu0 0.0
        %675 = vmatpush1.msra.mxu0 0.0
        %676 = vmatprep.subr.mxu0 0.0
        %677 = vmatpush1.msra.mxu0 0.0
        %678 = vmatprep.subr.mxu0 0.0
        %679 = vmatpush1.msra.mxu0 0.0
        %680 = vmatprep.subr.mxu0 0.0
        %681 = vmatpush1.msra.mxu0 0.0
        %682 = vmatprep.subr.mxu0 0.0
        %683 = vmatpush1.msra.mxu0 0.0
        %684 = vmatprep.subr.mxu0 0.0
        %685 = vmatpush1.msra.mxu0 0.0
        %686 = vmatprep.subr.mxu0 0.0
        %687 = vmatpush1.msra.mxu0 0.0
        %688 = vmatprep.subr.mxu0 0.0
        %689 = vmatpush1.msra.mxu0 0.0
        %690 = vmatprep.subr.mxu0 0.0
        %691 = vmatpush1.msra.mxu0 0.0
        %692 = vmatprep.subr.mxu0 0.0
        %693 = vmatpush1.msra.mxu0 0.0
        %694 = vmatprep.subr.mxu0 0.0
        %695 = vmatpush1.msra.mxu0 0.0
        %696 = vmatprep.subr.mxu0 0.0
        %697 = vmatpush1.msra.mxu0 %v213
        %698 = vmatprep.subr.mxu0 0.0
        %699 = vmatpush1.msra.mxu0 %v212
        %700 = vmatprep.subr.mxu0 0.0
        %701 = vmatpush2.msra.mxu0 0.0
        %702 = vmatprep.subr.mxu0 0.0
        %703 = vmatpush2.msra.mxu0 0.0
        %704 = vmatprep.subr.mxu0 0.0
        %705 = vmatpush2.msra.mxu0 0.0
        %706 = vmatprep.subr.mxu0 0.0
        %707 = vmatpush2.msra.mxu0 0.0
        %708 = vmatprep.subr.mxu0 0.0
        %709 = vmatpush2.msra.mxu0 0.0
        %710 = vmatprep.subr.mxu0 0.0
        %711 = vmatpush2.msra.mxu0 0.0
        %712 = vmatprep.subr.mxu0 0.0
        %713 = vmatpush2.msra.mxu0 0.0
        %714 = vmatprep.subr.mxu0 0.0
        %715 = vmatpush2.msra.mxu0 0.0
        %716 = vmatprep.subr.mxu0 0.0
        %717 = vmatpush2.msra.mxu0 0.0
        %718 = vmatprep.subr.mxu0 0.0
        %719 = vmatpush2.msra.mxu0 0.0
        %720 = vmatprep.subr.mxu0 0.0
        %721 = vmatpush2.msra.mxu0 0.0
        %722 = vmatprep.subr.mxu0 0.0
        %723 = vmatpush2.msra.mxu0 0.0
        %724 = vmatprep.subr.mxu0 0.0
        %725 = vmatpush2.msra.mxu0 0.0
        %726 = vmatprep.subr.mxu0 0.0
        %727 = vmatpush2.msra.mxu0 0.0
        %728 = vmatprep.subr.mxu0 0.0
        %729 = vmatpush2.msra.mxu0 0.0
        %730 = vmatprep.subr.mxu0 0.0
        %731 = vmatpush2.msra.mxu0 0.0
        %732 = vmatprep.mubr.f32.mxu0 0.0
        %733 = vmatmul.mubr.f32.gmra.mxu0 %v666
        %v734 = vpop.f32.mrf.mxu0
        %v735 = vadd.f32 %v317, %v734
        %v736 = vpop.f32.mrf.mxu0
        %737 = vdwg.mxu0
        %v738 = vmax.f32 %v735, 0.0
        %740 = vrot.lane.b32.xlu0 %v738, 16
        %v741 = vpop.permute.xlu0 %740
        %vm743 = vcmask 195712
        %744 = vst.msk [vmem:[%s188] sm:$0xff] %vm743, %v741
        %v745 = vld [vmem:[%s197] sm:$0xf]
        %v747 = vcombine.low %v745, %v745
        %748 = vrot.lane.b32.xlu0 %v747, 112
        %v749 = vpop.permute.xlu0 %748
        %v751 = vsel %vm220, %v745, %v749
        %753 = vrot.lane.b32.xlu0 %v751, 32
        %v754 = vpop.permute.xlu0 %753
        %756 = vmatprep.subr.mxu0 0.0
        %757 = vmatpush1.msra.mxu0 0.0
        %758 = vmatprep.subr.mxu0 0.0
        %759 = vmatpush1.msra.mxu0 0.0
        %760 = vmatprep.subr.mxu0 0.0
        %761 = vmatpush1.msra.mxu0 0.0
        %762 = vmatprep.subr.mxu0 0.0
        %763 = vmatpush1.msra.mxu0 0.0
        %764 = vmatprep.subr.mxu0 0.0
        %765 = vmatpush1.msra.mxu0 0.0
        %766 = vmatprep.subr.mxu0 0.0
        %767 = vmatpush1.msra.mxu0 0.0
        %768 = vmatprep.subr.mxu0 0.0
        %769 = vmatpush1.msra.mxu0 0.0
        %770 = vmatprep.subr.mxu0 0.0
        %771 = vmatpush1.msra.mxu0 0.0
        %772 = vmatprep.subr.mxu0 0.0
        %773 = vmatpush1.msra.mxu0 0.0
        %774 = vmatprep.subr.mxu0 0.0
        %775 = vmatpush1.msra.mxu0 0.0
        %776 = vmatprep.subr.mxu0 0.0
        %777 = vmatpush1.msra.mxu0 0.0
        %778 = vmatprep.subr.mxu0 0.0
        %779 = vmatpush1.msra.mxu0 0.0
        %780 = vmatprep.subr.mxu0 0.0
        %781 = vmatpush1.msra.mxu0 0.0
        %782 = vmatprep.subr.mxu0 0.0
        %783 = vmatpush1.msra.mxu0 0.0
        %784 = vmatprep.subr.mxu0 0.0
        %785 = vmatpush1.msra.mxu0 0.0
        %786 = vmatprep.subr.mxu0 0.0
        %787 = vmatpush1.msra.mxu0 %v754
        %788 = vmatprep.subr.mxu0 0.0
        %789 = vmatpush2.msra.mxu0 0.0
        %790 = vmatprep.subr.mxu0 0.0
        %791 = vmatpush2.msra.mxu0 0.0
        %792 = vmatprep.subr.mxu0 0.0
        %793 = vmatpush2.msra.mxu0 0.0
        %794 = vmatprep.subr.mxu0 0.0
        %795 = vmatpush2.msra.mxu0 0.0
        %796 = vmatprep.subr.mxu0 0.0
        %797 = vmatpush2.msra.mxu0 0.0
        %798 = vmatprep.subr.mxu0 0.0
        %799 = vmatpush2.msra.mxu0 0.0
        %800 = vmatprep.subr.mxu0 0.0
        %801 = vmatpush2.msra.mxu0 0.0
        %802 = vmatprep.subr.mxu0 0.0
        %803 = vmatpush2.msra.mxu0 0.0
        %804 = vmatprep.subr.mxu0 0.0
        %805 = vmatpush2.msra.mxu0 0.0
        %806 = vmatprep.subr.mxu0 0.0
        %807 = vmatpush2.msra.mxu0 0.0
        %808 = vmatprep.subr.mxu0 0.0
        %809 = vmatpush2.msra.mxu0 0.0
        %810 = vmatprep.subr.mxu0 0.0
        %811 = vmatpush2.msra.mxu0 0.0
        %812 = vmatprep.subr.mxu0 0.0
        %813 = vmatpush2.msra.mxu0 0.0
        %814 = vmatprep.subr.mxu0 0.0
        %815 = vmatpush2.msra.mxu0 0.0
        %816 = vmatprep.subr.mxu0 0.0
        %817 = vmatpush2.msra.mxu0 0.0
        %818 = vmatprep.subr.mxu0 0.0
        %819 = vmatpush2.msra.mxu0 0.0
        %820 = vmatprep.mubr.f32.mxu0 0.0
        %821 = vmatmul.mubr.f32.gmra.mxu0 %v224
        %v822 = vpop.f32.mrf.mxu0
        %v823 = vadd.f32 0.0, %v822
        %v824 = vpop.f32.mrf.mxu0
        %825 = vmatprep.mubr.f32.mxu0 0.0
        %826 = vmatmul.mubr.f32.gmra.mxu0 %v227
        %v827 = vpop.f32.mrf.mxu0
        %v828 = vadd.f32 0.0, %v827
        %v829 = vpop.f32.mrf.mxu0
        %830 = vdwg.mxu0
        %832 = vrot.lane.b32.xlu0 %v828, 127
        %v833 = vpop.permute.xlu0 %832
        %835 = vrot.lane.b32.xlu0 %v828, 15
        %v836 = vpop.permute.xlu0 %835
        %v838 = vsel %vm311, %v833, %v836
        %v839 = vadd.f32 %v823, %v838
        %v841 = vsel %vm319, %v839, 0
        %843 = vmatprep.subr.mxu0 0.0
        %844 = vmatpush1.msra.mxu0 0.0
        %845 = vmatprep.subr.mxu0 0.0
        %846 = vmatpush1.msra.mxu0 0.0
        %847 = vmatprep.subr.mxu0 0.0
        %848 = vmatpush1.msra.mxu0 0.0
        %849 = vmatprep.subr.mxu0 0.0
        %850 = vmatpush1.msra.mxu0 0.0
        %851 = vmatprep.subr.mxu0 0.0
        %852 = vmatpush1.msra.mxu0 0.0
        %853 = vmatprep.subr.mxu0 0.0
        %854 = vmatpush1.msra.mxu0 0.0
        %855 = vmatprep.subr.mxu0 0.0
        %856 = vmatpush1.msra.mxu0 0.0
        %857 = vmatprep.subr.mxu0 0.0
        %858 = vmatpush1.msra.mxu0 0.0
        %859 = vmatprep.subr.mxu0 0.0
        %860 = vmatpush1.msra.mxu0 0.0
        %861 = vmatprep.subr.mxu0 0.0
        %862 = vmatpush1.msra.mxu0 0.0
        %863 = vmatprep.subr.mxu0 0.0
        %864 = vmatpush1.msra.mxu0 0.0
        %865 = vmatprep.subr.mxu0 0.0
        %866 = vmatpush1.msra.mxu0 0.0
        %867 = vmatprep.subr.mxu0 0.0
        %868 = vmatpush1.msra.mxu0 0.0
        %869 = vmatprep.subr.mxu0 0.0
        %870 = vmatpush1.msra.mxu0 0.0
        %871 = vmatprep.subr.mxu0 0.0
        %872 = vmatpush1.msra.mxu0 %v213
        %873 = vmatprep.subr.mxu0 0.0
        %874 = vmatpush1.msra.mxu0 %v212
        %875 = vmatprep.subr.mxu0 0.0
        %876 = vmatpush2.msra.mxu0 0.0
        %877 = vmatprep.subr.mxu0 0.0
        %878 = vmatpush2.msra.mxu0 0.0
        %879 = vmatprep.subr.mxu0 0.0
        %880 = vmatpush2.msra.mxu0 0.0
        %881 = vmatprep.subr.mxu0 0.0
        %882 = vmatpush2.msra.mxu0 0.0
        %883 = vmatprep.subr.mxu0 0.0
        %884 = vmatpush2.msra.mxu0 0.0
        %885 = vmatprep.subr.mxu0 0.0
        %886 = vmatpush2.msra.mxu0 0.0
        %887 = vmatprep.subr.mxu0 0.0
        %888 = vmatpush2.msra.mxu0 0.0
        %889 = vmatprep.subr.mxu0 0.0
        %890 = vmatpush2.msra.mxu0 0.0
        %891 = vmatprep.subr.mxu0 0.0
        %892 = vmatpush2.msra.mxu0 0.0
        %893 = vmatprep.subr.mxu0 0.0
        %894 = vmatpush2.msra.mxu0 0.0
        %895 = vmatprep.subr.mxu0 0.0
        %896 = vmatpush2.msra.mxu0 0.0
        %897 = vmatprep.subr.mxu0 0.0
        %898 = vmatpush2.msra.mxu0 0.0
        %899 = vmatprep.subr.mxu0 0.0
        %900 = vmatpush2.msra.mxu0 0.0
        %901 = vmatprep.subr.mxu0 0.0
        %902 = vmatpush2.msra.mxu0 0.0
        %903 = vmatprep.subr.mxu0 0.0
        %904 = vmatpush2.msra.mxu0 0.0
        %905 = vmatprep.subr.mxu0 0.0
        %906 = vmatpush2.msra.mxu0 0.0
        %907 = vmatprep.mubr.f32.mxu0 0.0
        %908 = vmatmul.mubr.f32.gmra.mxu0 %v841
        %v909 = vpop.f32.mrf.mxu0
        %v910 = vadd.f32 %v317, %v909
        %v911 = vpop.f32.mrf.mxu0
        %912 = vdwg.mxu0
        %v913 = vmax.f32 %v910, 0.0
        %915 = vrot.lane.b32.xlu0 %v913, 24
        %v916 = vpop.permute.xlu0 %915
        %vm918 = vcmask 261312
        %919 = vst.msk [vmem:[%s188] sm:$0xff] %vm918, %v916
        %v920 = vld [vmem:[%s197 + $0x4] sm:$0xf]
        %v922 = vcombine.low %v920, %v920
        %923 = vrot.lane.b32.xlu0 %v922, 112
        %v924 = vpop.permute.xlu0 %923
        %v926 = vsel %vm220, %v920, %v924
        %927 = vmatprep.subr.mxu0 0.0
        %928 = vmatpush1.msra.mxu0 0.0
        %929 = vmatprep.subr.mxu0 0.0
        %930 = vmatpush1.msra.mxu0 0.0
        %931 = vmatprep.subr.mxu0 0.0
        %932 = vmatpush1.msra.mxu0 0.0
        %933 = vmatprep.subr.mxu0 0.0
        %934 = vmatpush1.msra.mxu0 0.0
        %935 = vmatprep.subr.mxu0 0.0
        %936 = vmatpush1.msra.mxu0 0.0
        %937 = vmatprep.subr.mxu0 0.0
        %938 = vmatpush1.msra.mxu0 0.0
        %939 = vmatprep.subr.mxu0 0.0
        %940 = vmatpush1.msra.mxu0 0.0
        %941 = vmatprep.subr.mxu0 0.0
        %942 = vmatpush1.msra.mxu0 0.0
        %943 = vmatprep.subr.mxu0 0.0
        %944 = vmatpush1.msra.mxu0 0.0
        %945 = vmatprep.subr.mxu0 0.0
        %946 = vmatpush1.msra.mxu0 0.0
        %947 = vmatprep.subr.mxu0 0.0
        %948 = vmatpush1.msra.mxu0 0.0
        %949 = vmatprep.subr.mxu0 0.0
        %950 = vmatpush1.msra.mxu0 0.0
        %951 = vmatprep.subr.mxu0 0.0
        %952 = vmatpush1.msra.mxu0 0.0
        %953 = vmatprep.subr.mxu0 0.0
        %954 = vmatpush1.msra.mxu0 0.0
        %955 = vmatprep.subr.mxu0 0.0
        %956 = vmatpush1.msra.mxu0 0.0
        %957 = vmatprep.subr.mxu0 0.0
        %958 = vmatpush1.msra.mxu0 %v926
        %959 = vmatprep.subr.mxu0 0.0
        %960 = vmatpush2.msra.mxu0 0.0
        %961 = vmatprep.subr.mxu0 0.0
        %962 = vmatpush2.msra.mxu0 0.0
        %963 = vmatprep.subr.mxu0 0.0
        %964 = vmatpush2.msra.mxu0 0.0
        %965 = vmatprep.subr.mxu0 0.0
        %966 = vmatpush2.msra.mxu0 0.0
        %967 = vmatprep.subr.mxu0 0.0
        %968 = vmatpush2.msra.mxu0 0.0
        %969 = vmatprep.subr.mxu0 0.0
        %970 = vmatpush2.msra.mxu0 0.0
        %971 = vmatprep.subr.mxu0 0.0
        %972 = vmatpush2.msra.mxu0 0.0
        %973 = vmatprep.subr.mxu0 0.0
        %974 = vmatpush2.msra.mxu0 0.0
        %975 = vmatprep.subr.mxu0 0.0
        %976 = vmatpush2.msra.mxu0 0.0
        %977 = vmatprep.subr.mxu0 0.0
        %978 = vmatpush2.msra.mxu0 0.0
        %979 = vmatprep.subr.mxu0 0.0
        %980 = vmatpush2.msra.mxu0 0.0
        %981 = vmatprep.subr.mxu0 0.0
        %982 = vmatpush2.msra.mxu0 0.0
        %983 = vmatprep.subr.mxu0 0.0
        %984 = vmatpush2.msra.mxu0 0.0
        %985 = vmatprep.subr.mxu0 0.0
        %986 = vmatpush2.msra.mxu0 0.0
        %987 = vmatprep.subr.mxu0 0.0
        %988 = vmatpush2.msra.mxu0 0.0
        %989 = vmatprep.subr.mxu0 0.0
        %990 = vmatpush2.msra.mxu0 0.0
        %991 = vmatprep.mubr.f32.mxu0 0.0
        %992 = vmatmul.mubr.f32.gmra.mxu0 %v224
        %v993 = vpop.f32.mrf.mxu0
        %v994 = vadd.f32 0.0, %v993
        %v995 = vpop.f32.mrf.mxu0
        %996 = vmatprep.mubr.f32.mxu0 0.0
        %997 = vmatmul.mubr.f32.gmra.mxu0 %v227
        %v998 = vpop.f32.mrf.mxu0
        %v999 = vadd.f32 0.0, %v998
        %v1000 = vpop.f32.mrf.mxu0
        %1001 = vdwg.mxu0
        %1003 = vrot.lane.b32.xlu0 %v999, 127
        %v1004 = vpop.permute.xlu0 %1003
        %1006 = vrot.lane.b32.xlu0 %v999, 15
        %v1007 = vpop.permute.xlu0 %1006
        %v1009 = vsel %vm311, %v1004, %v1007
        %v1010 = vadd.f32 %v994, %v1009
        %v1012 = vsel %vm319, %v1010, 0
        %1014 = vmatprep.subr.mxu0 0.0
        %1015 = vmatpush1.msra.mxu0 0.0
        %1016 = vmatprep.subr.mxu0 0.0
        %1017 = vmatpush1.msra.mxu0 0.0
        %1018 = vmatprep.subr.mxu0 0.0
        %1019 = vmatpush1.msra.mxu0 0.0
        %1020 = vmatprep.subr.mxu0 0.0
        %1021 = vmatpush1.msra.mxu0 0.0
        %1022 = vmatprep.subr.mxu0 0.0
        %1023 = vmatpush1.msra.mxu0 0.0
        %1024 = vmatprep.subr.mxu0 0.0
        %1025 = vmatpush1.msra.mxu0 0.0
        %1026 = vmatprep.subr.mxu0 0.0
        %1027 = vmatpush1.msra.mxu0 0.0
        %1028 = vmatprep.subr.mxu0 0.0
        %1029 = vmatpush1.msra.mxu0 0.0
        %1030 = vmatprep.subr.mxu0 0.0
        %1031 = vmatpush1.msra.mxu0 0.0
        %1032 = vmatprep.subr.mxu0 0.0
        %1033 = vmatpush1.msra.mxu0 0.0
        %1034 = vmatprep.subr.mxu0 0.0
        %1035 = vmatpush1.msra.mxu0 0.0
        %1036 = vmatprep.subr.mxu0 0.0
        %1037 = vmatpush1.msra.mxu0 0.0
        %1038 = vmatprep.subr.mxu0 0.0
        %1039 = vmatpush1.msra.mxu0 0.0
        %1040 = vmatprep.subr.mxu0 0.0
        %1041 = vmatpush1.msra.mxu0 0.0
        %1042 = vmatprep.subr.mxu0 0.0
        %1043 = vmatpush1.msra.mxu0 %v213
        %1044 = vmatprep.subr.mxu0 0.0
        %1045 = vmatpush1.msra.mxu0 %v212
        %1046 = vmatprep.subr.mxu0 0.0
        %1047 = vmatpush2.msra.mxu0 0.0
        %1048 = vmatprep.subr.mxu0 0.0
        %1049 = vmatpush2.msra.mxu0 0.0
        %1050 = vmatprep.subr.mxu0 0.0
        %1051 = vmatpush2.msra.mxu0 0.0
        %1052 = vmatprep.subr.mxu0 0.0
        %1053 = vmatpush2.msra.mxu0 0.0
        %1054 = vmatprep.subr.mxu0 0.0
        %1055 = vmatpush2.msra.mxu0 0.0
        %1056 = vmatprep.subr.mxu0 0.0
        %1057 = vmatpush2.msra.mxu0 0.0
        %1058 = vmatprep.subr.mxu0 0.0
        %1059 = vmatpush2.msra.mxu0 0.0
        %1060 = vmatprep.subr.mxu0 0.0
        %1061 = vmatpush2.msra.mxu0 0.0
        %1062 = vmatprep.subr.mxu0 0.0
        %1063 = vmatpush2.msra.mxu0 0.0
        %1064 = vmatprep.subr.mxu0 0.0
        %1065 = vmatpush2.msra.mxu0 0.0
        %1066 = vmatprep.subr.mxu0 0.0
        %1067 = vmatpush2.msra.mxu0 0.0
        %1068 = vmatprep.subr.mxu0 0.0
        %1069 = vmatpush2.msra.mxu0 0.0
        %1070 = vmatprep.subr.mxu0 0.0
        %1071 = vmatpush2.msra.mxu0 0.0
        %1072 = vmatprep.subr.mxu0 0.0
        %1073 = vmatpush2.msra.mxu0 0.0
        %1074 = vmatprep.subr.mxu0 0.0
        %1075 = vmatpush2.msra.mxu0 0.0
        %1076 = vmatprep.subr.mxu0 0.0
        %1077 = vmatpush2.msra.mxu0 0.0
        %1078 = vmatprep.mubr.f32.mxu0 0.0
        %1079 = vmatmul.mubr.f32.gmra.mxu0 %v1012
        %v1080 = vpop.f32.mrf.mxu0
        %v1081 = vadd.f32 %v317, %v1080
        %v1082 = vpop.f32.mrf.mxu0
        %1083 = vdwg.mxu0
        %v1084 = vmax.f32 %v1081, 0.0
        %1086 = vrot.lane.b32.xlu0 %v1084, 32
        %v1087 = vpop.permute.xlu0 %1086
        %vm1089 = vcmask 326912
        %1090 = vst.msk [vmem:[%s188] sm:$0xff] %vm1089, %v1087
        %v1091 = vld [vmem:[%s197 + $0x4] sm:$0xf]
        %v1093 = vcombine.low %v1091, %v1091
        %1094 = vrot.lane.b32.xlu0 %v1093, 112
        %v1095 = vpop.permute.xlu0 %1094
        %v1097 = vsel %vm220, %v1091, %v1095
        %1099 = vrot.lane.b32.xlu0 %v1097, 96
        %v1100 = vpop.permute.xlu0 %1099
        %1102 = vmatprep.subr.mxu0 0.0
        %1103 = vmatpush1.msra.mxu0 0.0
        %1104 = vmatprep.subr.mxu0 0.0
        %1105 = vmatpush1.msra.mxu0 0.0
        %1106 = vmatprep.subr.mxu0 0.0
        %1107 = vmatpush1.msra.mxu0 0.0
        %1108 = vmatprep.subr.mxu0 0.0
        %1109 = vmatpush1.msra.mxu0 0.0
        %1110 = vmatprep.subr.mxu0 0.0
        %1111 = vmatpush1.msra.mxu0 0.0
        %1112 = vmatprep.subr.mxu0 0.0
        %1113 = vmatpush1.msra.mxu0 0.0
        %1114 = vmatprep.subr.mxu0 0.0
        %1115 = vmatpush1.msra.mxu0 0.0
        %1116 = vmatprep.subr.mxu0 0.0
        %1117 = vmatpush1.msra.mxu0 0.0
        %1118 = vmatprep.subr.mxu0 0.0
        %1119 = vmatpush1.msra.mxu0 0.0
        %1120 = vmatprep.subr.mxu0 0.0
        %1121 = vmatpush1.msra.mxu0 0.0
        %1122 = vmatprep.subr.mxu0 0.0
        %1123 = vmatpush1.msra.mxu0 0.0
        %1124 = vmatprep.subr.mxu0 0.0
        %1125 = vmatpush1.msra.mxu0 0.0
        %1126 = vmatprep.subr.mxu0 0.0
        %1127 = vmatpush1.msra.mxu0 0.0
        %1128 = vmatprep.subr.mxu0 0.0
        %1129 = vmatpush1.msra.mxu0 0.0
        %1130 = vmatprep.subr.mxu0 0.0
        %1131 = vmatpush1.msra.mxu0 0.0
        %1132 = vmatprep.subr.mxu0 0.0
        %1133 = vmatpush1.msra.mxu0 %v1100
        %1134 = vmatprep.subr.mxu0 0.0
        %1135 = vmatpush2.msra.mxu0 0.0
        %1136 = vmatprep.subr.mxu0 0.0
        %1137 = vmatpush2.msra.mxu0 0.0
        %1138 = vmatprep.subr.mxu0 0.0
        %1139 = vmatpush2.msra.mxu0 0.0
        %1140 = vmatprep.subr.mxu0 0.0
        %1141 = vmatpush2.msra.mxu0 0.0
        %1142 = vmatprep.subr.mxu0 0.0
        %1143 = vmatpush2.msra.mxu0 0.0
        %1144 = vmatprep.subr.mxu0 0.0
        %1145 = vmatpush2.msra.mxu0 0.0
        %1146 = vmatprep.subr.mxu0 0.0
        %1147 = vmatpush2.msra.mxu0 0.0
        %1148 = vmatprep.subr.mxu0 0.0
        %1149 = vmatpush2.msra.mxu0 0.0
        %1150 = vmatprep.subr.mxu0 0.0
        %1151 = vmatpush2.msra.mxu0 0.0
        %1152 = vmatprep.subr.mxu0 0.0
        %1153 = vmatpush2.msra.mxu0 0.0
        %1154 = vmatprep.subr.mxu0 0.0
        %1155 = vmatpush2.msra.mxu0 0.0
        %1156 = vmatprep.subr.mxu0 0.0
        %1157 = vmatpush2.msra.mxu0 0.0
        %1158 = vmatprep.subr.mxu0 0.0
        %1159 = vmatpush2.msra.mxu0 0.0
        %1160 = vmatprep.subr.mxu0 0.0
        %1161 = vmatpush2.msra.mxu0 0.0
        %1162 = vmatprep.subr.mxu0 0.0
        %1163 = vmatpush2.msra.mxu0 0.0
        %1164 = vmatprep.subr.mxu0 0.0
        %1165 = vmatpush2.msra.mxu0 0.0
        %1166 = vmatprep.mubr.f32.mxu0 0.0
        %1167 = vmatmul.mubr.f32.gmra.mxu0 %v224
        %v1168 = vpop.f32.mrf.mxu0
        %v1169 = vadd.f32 0.0, %v1168
        %v1170 = vpop.f32.mrf.mxu0
        %1171 = vmatprep.mubr.f32.mxu0 0.0
        %1172 = vmatmul.mubr.f32.gmra.mxu0 %v227
        %v1173 = vpop.f32.mrf.mxu0
        %v1174 = vadd.f32 0.0, %v1173
        %v1175 = vpop.f32.mrf.mxu0
        %1176 = vdwg.mxu0
        %1178 = vrot.lane.b32.xlu0 %v1174, 127
        %v1179 = vpop.permute.xlu0 %1178
        %1181 = vrot.lane.b32.xlu0 %v1174, 15
        %v1182 = vpop.permute.xlu0 %1181
        %v1184 = vsel %vm311, %v1179, %v1182
        %v1185 = vadd.f32 %v1169, %v1184
        %v1187 = vsel %vm319, %v1185, 0
        %1189 = vmatprep.subr.mxu0 0.0
        %1190 = vmatpush1.msra.mxu0 0.0
        %1191 = vmatprep.subr.mxu0 0.0
        %1192 = vmatpush1.msra.mxu0 0.0
        %1193 = vmatprep.subr.mxu0 0.0
        %1194 = vmatpush1.msra.mxu0 0.0
        %1195 = vmatprep.subr.mxu0 0.0
        %1196 = vmatpush1.msra.mxu0 0.0
        %1197 = vmatprep.subr.mxu0 0.0
        %1198 = vmatpush1.msra.mxu0 0.0
        %1199 = vmatprep.subr.mxu0 0.0
        %1200 = vmatpush1.msra.mxu0 0.0
        %1201 = vmatprep.subr.mxu0 0.0
        %1202 = vmatpush1.msra.mxu0 0.0
        %1203 = vmatprep.subr.mxu0 0.0
        %1204 = vmatpush1.msra.mxu0 0.0
        %1205 = vmatprep.subr.mxu0 0.0
        %1206 = vmatpush1.msra.mxu0 0.0
        %1207 = vmatprep.subr.mxu0 0.0
        %1208 = vmatpush1.msra.mxu0 0.0
        %1209 = vmatprep.subr.mxu0 0.0
        %1210 = vmatpush1.msra.mxu0 0.0
        %1211 = vmatprep.subr.mxu0 0.0
        %1212 = vmatpush1.msra.mxu0 0.0
        %1213 = vmatprep.subr.mxu0 0.0
        %1214 = vmatpush1.msra.mxu0 0.0
        %1215 = vmatprep.subr.mxu0 0.0
        %1216 = vmatpush1.msra.mxu0 0.0
        %1217 = vmatprep.subr.mxu0 0.0
        %1218 = vmatpush1.msra.mxu0 %v213
        %1219 = vmatprep.subr.mxu0 0.0
        %1220 = vmatpush1.msra.mxu0 %v212
        %1221 = vmatprep.subr.mxu0 0.0
        %1222 = vmatpush2.msra.mxu0 0.0
        %1223 = vmatprep.subr.mxu0 0.0
        %1224 = vmatpush2.msra.mxu0 0.0
        %1225 = vmatprep.subr.mxu0 0.0
        %1226 = vmatpush2.msra.mxu0 0.0
        %1227 = vmatprep.subr.mxu0 0.0
        %1228 = vmatpush2.msra.mxu0 0.0
        %1229 = vmatprep.subr.mxu0 0.0
        %1230 = vmatpush2.msra.mxu0 0.0
        %1231 = vmatprep.subr.mxu0 0.0
        %1232 = vmatpush2.msra.mxu0 0.0
        %1233 = vmatprep.subr.mxu0 0.0
        %1234 = vmatpush2.msra.mxu0 0.0
        %1235 = vmatprep.subr.mxu0 0.0
        %1236 = vmatpush2.msra.mxu0 0.0
        %1237 = vmatprep.subr.mxu0 0.0
        %1238 = vmatpush2.msra.mxu0 0.0
        %1239 = vmatprep.subr.mxu0 0.0
        %1240 = vmatpush2.msra.mxu0 0.0
        %1241 = vmatprep.subr.mxu0 0.0
        %1242 = vmatpush2.msra.mxu0 0.0
        %1243 = vmatprep.subr.mxu0 0.0
        %1244 = vmatpush2.msra.mxu0 0.0
        %1245 = vmatprep.subr.mxu0 0.0
        %1246 = vmatpush2.msra.mxu0 0.0
        %1247 = vmatprep.subr.mxu0 0.0
        %1248 = vmatpush2.msra.mxu0 0.0
        %1249 = vmatprep.subr.mxu0 0.0
        %1250 = vmatpush2.msra.mxu0 0.0
        %1251 = vmatprep.subr.mxu0 0.0
        %1252 = vmatpush2.msra.mxu0 0.0
        %1253 = vmatprep.mubr.f32.mxu0 0.0
        %1254 = vmatmul.mubr.f32.gmra.mxu0 %v1187
        %v1255 = vpop.f32.mrf.mxu0
        %v1256 = vadd.f32 %v317, %v1255
        %v1257 = vpop.f32.mrf.mxu0
        %1258 = vdwg.mxu0
        %v1259 = vmax.f32 %v1256, 0.0
        %1261 = vrot.lane.b32.xlu0 %v1259, 40
        %v1262 = vpop.permute.xlu0 %1261
        %vm1264 = vcmask 392512
        %1265 = vst.msk [vmem:[%s188] sm:$0xff] %vm1264, %v1262
        %v1266 = vld [vmem:[%s197 + $0x4] sm:$0xf]
        %v1268 = vcombine.low %v1266, %v1266
        %1269 = vrot.lane.b32.xlu0 %v1268, 112
        %v1270 = vpop.permute.xlu0 %1269
        %v1272 = vsel %vm220, %v1266, %v1270
        %1274 = vrot.lane.b32.xlu0 %v1272, 64
        %v1275 = vpop.permute.xlu0 %1274
        %1277 = vmatprep.subr.mxu0 0.0
        %1278 = vmatpush1.msra.mxu0 0.0
        %1279 = vmatprep.subr.mxu0 0.0
        %1280 = vmatpush1.msra.mxu0 0.0
        %1281 = vmatprep.subr.mxu0 0.0
        %1282 = vmatpush1.msra.mxu0 0.0
        %1283 = vmatprep.subr.mxu0 0.0
        %1284 = vmatpush1.msra.mxu0 0.0
        %1285 = vmatprep.subr.mxu0 0.0
        %1286 = vmatpush1.msra.mxu0 0.0
        %1287 = vmatprep.subr.mxu0 0.0
        %1288 = vmatpush1.msra.mxu0 0.0
        %1289 = vmatprep.subr.mxu0 0.0
        %1290 = vmatpush1.msra.mxu0 0.0
        %1291 = vmatprep.subr.mxu0 0.0
        %1292 = vmatpush1.msra.mxu0 0.0
        %1293 = vmatprep.subr.mxu0 0.0
        %1294 = vmatpush1.msra.mxu0 0.0
        %1295 = vmatprep.subr.mxu0 0.0
        %1296 = vmatpush1.msra.mxu0 0.0
        %1297 = vmatprep.subr.mxu0 0.0
        %1298 = vmatpush1.msra.mxu0 0.0
        %1299 = vmatprep.subr.mxu0 0.0
        %1300 = vmatpush1.msra.mxu0 0.0
        %1301 = vmatprep.subr.mxu0 0.0
        %1302 = vmatpush1.msra.mxu0 0.0
        %1303 = vmatprep.subr.mxu0 0.0
        %1304 = vmatpush1.msra.mxu0 0.0
        %1305 = vmatprep.subr.mxu0 0.0
        %1306 = vmatpush1.msra.mxu0 0.0
        %1307 = vmatprep.subr.mxu0 0.0
        %1308 = vmatpush1.msra.mxu0 %v1275
        %1309 = vmatprep.subr.mxu0 0.0
        %1310 = vmatpush2.msra.mxu0 0.0
        %1311 = vmatprep.subr.mxu0 0.0
        %1312 = vmatpush2.msra.mxu0 0.0
        %1313 = vmatprep.subr.mxu0 0.0
        %1314 = vmatpush2.msra.mxu0 0.0
        %1315 = vmatprep.subr.mxu0 0.0
        %1316 = vmatpush2.msra.mxu0 0.0
        %1317 = vmatprep.subr.mxu0 0.0
        %1318 = vmatpush2.msra.mxu0 0.0
        %1319 = vmatprep.subr.mxu0 0.0
        %1320 = vmatpush2.msra.mxu0 0.0
        %1321 = vmatprep.subr.mxu0 0.0
        %1322 = vmatpush2.msra.mxu0 0.0
        %1323 = vmatprep.subr.mxu0 0.0
        %1324 = vmatpush2.msra.mxu0 0.0
        %1325 = vmatprep.subr.mxu0 0.0
        %1326 = vmatpush2.msra.mxu0 0.0
        %1327 = vmatprep.subr.mxu0 0.0
        %1328 = vmatpush2.msra.mxu0 0.0
        %1329 = vmatprep.subr.mxu0 0.0
        %1330 = vmatpush2.msra.mxu0 0.0
        %1331 = vmatprep.subr.mxu0 0.0
        %1332 = vmatpush2.msra.mxu0 0.0
        %1333 = vmatprep.subr.mxu0 0.0
        %1334 = vmatpush2.msra.mxu0 0.0
        %1335 = vmatprep.subr.mxu0 0.0
        %1336 = vmatpush2.msra.mxu0 0.0
        %1337 = vmatprep.subr.mxu0 0.0
        %1338 = vmatpush2.msra.mxu0 0.0
        %1339 = vmatprep.subr.mxu0 0.0
        %1340 = vmatpush2.msra.mxu0 0.0
        %1341 = vmatprep.mubr.f32.mxu0 0.0
        %1342 = vmatmul.mubr.f32.gmra.mxu0 %v224
        %v1343 = vpop.f32.mrf.mxu0
        %v1344 = vadd.f32 0.0, %v1343
        %v1345 = vpop.f32.mrf.mxu0
        %1346 = vmatprep.mubr.f32.mxu0 0.0
        %1347 = vmatmul.mubr.f32.gmra.mxu0 %v227
        %v1348 = vpop.f32.mrf.mxu0
        %v1349 = vadd.f32 0.0, %v1348
        %v1350 = vpop.f32.mrf.mxu0
        %1351 = vdwg.mxu0
        %1353 = vrot.lane.b32.xlu0 %v1349, 127
        %v1354 = vpop.permute.xlu0 %1353
        %1356 = vrot.lane.b32.xlu0 %v1349, 15
        %v1357 = vpop.permute.xlu0 %1356
        %v1359 = vsel %vm311, %v1354, %v1357
        %v1360 = vadd.f32 %v1344, %v1359
        %v1362 = vsel %vm319, %v1360, 0
        %1364 = vmatprep.subr.mxu0 0.0
        %1365 = vmatpush1.msra.mxu0 0.0
        %1366 = vmatprep.subr.mxu0 0.0
        %1367 = vmatpush1.msra.mxu0 0.0
        %1368 = vmatprep.subr.mxu0 0.0
        %1369 = vmatpush1.msra.mxu0 0.0
        %1370 = vmatprep.subr.mxu0 0.0
        %1371 = vmatpush1.msra.mxu0 0.0
        %1372 = vmatprep.subr.mxu0 0.0
        %1373 = vmatpush1.msra.mxu0 0.0
        %1374 = vmatprep.subr.mxu0 0.0
        %1375 = vmatpush1.msra.mxu0 0.0
        %1376 = vmatprep.subr.mxu0 0.0
        %1377 = vmatpush1.msra.mxu0 0.0
        %1378 = vmatprep.subr.mxu0 0.0
        %1379 = vmatpush1.msra.mxu0 0.0
        %1380 = vmatprep.subr.mxu0 0.0
        %1381 = vmatpush1.msra.mxu0 0.0
        %1382 = vmatprep.subr.mxu0 0.0
        %1383 = vmatpush1.msra.mxu0 0.0
        %1384 = vmatprep.subr.mxu0 0.0
        %1385 = vmatpush1.msra.mxu0 0.0
        %1386 = vmatprep.subr.mxu0 0.0
        %1387 = vmatpush1.msra.mxu0 0.0
        %1388 = vmatprep.subr.mxu0 0.0
        %1389 = vmatpush1.msra.mxu0 0.0
        %1390 = vmatprep.subr.mxu0 0.0
        %1391 = vmatpush1.msra.mxu0 0.0
        %1392 = vmatprep.subr.mxu0 0.0
        %1393 = vmatpush1.msra.mxu0 %v213
        %1394 = vmatprep.subr.mxu0 0.0
        %1395 = vmatpush1.msra.mxu0 %v212
        %1396 = vmatprep.subr.mxu0 0.0
        %1397 = vmatpush2.msra.mxu0 0.0
        %1398 = vmatprep.subr.mxu0 0.0
        %1399 = vmatpush2.msra.mxu0 0.0
        %1400 = vmatprep.subr.mxu0 0.0
        %1401 = vmatpush2.msra.mxu0 0.0
        %1402 = vmatprep.subr.mxu0 0.0
        %1403 = vmatpush2.msra.mxu0 0.0
        %1404 = vmatprep.subr.mxu0 0.0
        %1405 = vmatpush2.msra.mxu0 0.0
        %1406 = vmatprep.subr.mxu0 0.0
        %1407 = vmatpush2.msra.mxu0 0.0
        %1408 = vmatprep.subr.mxu0 0.0
        %1409 = vmatpush2.msra.mxu0 0.0
        %1410 = vmatprep.subr.mxu0 0.0
        %1411 = vmatpush2.msra.mxu0 0.0
        %1412 = vmatprep.subr.mxu0 0.0
        %1413 = vmatpush2.msra.mxu0 0.0
        %1414 = vmatprep.subr.mxu0 0.0
        %1415 = vmatpush2.msra.mxu0 0.0
        %1416 = vmatprep.subr.mxu0 0.0
        %1417 = vmatpush2.msra.mxu0 0.0
        %1418 = vmatprep.subr.mxu0 0.0
        %1419 = vmatpush2.msra.mxu0 0.0
        %1420 = vmatprep.subr.mxu0 0.0
        %1421 = vmatpush2.msra.mxu0 0.0
        %1422 = vmatprep.subr.mxu0 0.0
        %1423 = vmatpush2.msra.mxu0 0.0
        %1424 = vmatprep.subr.mxu0 0.0
        %1425 = vmatpush2.msra.mxu0 0.0
        %1426 = vmatprep.subr.mxu0 0.0
        %1427 = vmatpush2.msra.mxu0 0.0
        %1428 = vmatprep.mubr.f32.mxu0 0.0
        %1429 = vmatmul.mubr.f32.gmra.mxu0 %v1362
        %v1430 = vpop.f32.mrf.mxu0
        %v1431 = vadd.f32 %v317, %v1430
        %v1432 = vpop.f32.mrf.mxu0
        %1433 = vdwg.mxu0
        %v1434 = vmax.f32 %v1431, 0.0
        %1436 = vrot.lane.b32.xlu0 %v1434, 48
        %v1437 = vpop.permute.xlu0 %1436
        %vm1439 = vcmask 458112
        %1440 = vst.msk [vmem:[%s188] sm:$0xff] %vm1439, %v1437
        %v1441 = vld [vmem:[%s197 + $0x4] sm:$0xf]
        %v1443 = vcombine.low %v1441, %v1441
        %1444 = vrot.lane.b32.xlu0 %v1443, 112
        %v1445 = vpop.permute.xlu0 %1444
        %v1447 = vsel %vm220, %v1441, %v1445
        %1449 = vrot.lane.b32.xlu0 %v1447, 32
        %v1450 = vpop.permute.xlu0 %1449
        %1452 = vmatprep.subr.mxu0 0.0
        %1453 = vmatpush1.msra.mxu0 0.0
        %1454 = vmatprep.subr.mxu0 0.0
        %1455 = vmatpush1.msra.mxu0 0.0
        %1456 = vmatprep.subr.mxu0 0.0
        %1457 = vmatpush1.msra.mxu0 0.0
        %1458 = vmatprep.subr.mxu0 0.0
        %1459 = vmatpush1.msra.mxu0 0.0
        %1460 = vmatprep.subr.mxu0 0.0
        %1461 = vmatpush1.msra.mxu0 0.0
        %1462 = vmatprep.subr.mxu0 0.0
        %1463 = vmatpush1.msra.mxu0 0.0
        %1464 = vmatprep.subr.mxu0 0.0
        %1465 = vmatpush1.msra.mxu0 0.0
        %1466 = vmatprep.subr.mxu0 0.0
        %1467 = vmatpush1.msra.mxu0 0.0
        %1468 = vmatprep.subr.mxu0 0.0
        %1469 = vmatpush1.msra.mxu0 0.0
        %1470 = vmatprep.subr.mxu0 0.0
        %1471 = vmatpush1.msra.mxu0 0.0
        %1472 = vmatprep.subr.mxu0 0.0
        %1473 = vmatpush1.msra.mxu0 0.0
        %1474 = vmatprep.subr.mxu0 0.0
        %1475 = vmatpush1.msra.mxu0 0.0
        %1476 = vmatprep.subr.mxu0 0.0
        %1477 = vmatpush1.msra.mxu0 0.0
        %1478 = vmatprep.subr.mxu0 0.0
        %1479 = vmatpush1.msra.mxu0 0.0
        %1480 = vmatprep.subr.mxu0 0.0
        %1481 = vmatpush1.msra.mxu0 0.0
        %1482 = vmatprep.subr.mxu0 0.0
        %1483 = vmatpush1.msra.mxu0 %v1450
        %1484 = vmatprep.subr.mxu0 0.0
        %1485 = vmatpush2.msra.mxu0 0.0
        %1486 = vmatprep.subr.mxu0 0.0
        %1487 = vmatpush2.msra.mxu0 0.0
        %1488 = vmatprep.subr.mxu0 0.0
        %1489 = vmatpush2.msra.mxu0 0.0
        %1490 = vmatprep.subr.mxu0 0.0
        %1491 = vmatpush2.msra.mxu0 0.0
        %1492 = vmatprep.subr.mxu0 0.0
        %1493 = vmatpush2.msra.mxu0 0.0
        %1494 = vmatprep.subr.mxu0 0.0
        %1495 = vmatpush2.msra.mxu0 0.0
        %1496 = vmatprep.subr.mxu0 0.0
        %1497 = vmatpush2.msra.mxu0 0.0
        %1498 = vmatprep.subr.mxu0 0.0
        %1499 = vmatpush2.msra.mxu0 0.0
        %1500 = vmatprep.subr.mxu0 0.0
        %1501 = vmatpush2.msra.mxu0 0.0
        %1502 = vmatprep.subr.mxu0 0.0
        %1503 = vmatpush2.msra.mxu0 0.0
        %1504 = vmatprep.subr.mxu0 0.0
        %1505 = vmatpush2.msra.mxu0 0.0
        %1506 = vmatprep.subr.mxu0 0.0
        %1507 = vmatpush2.msra.mxu0 0.0
        %1508 = vmatprep.subr.mxu0 0.0
        %1509 = vmatpush2.msra.mxu0 0.0
        %1510 = vmatprep.subr.mxu0 0.0
        %1511 = vmatpush2.msra.mxu0 0.0
        %1512 = vmatprep.subr.mxu0 0.0
        %1513 = vmatpush2.msra.mxu0 0.0
        %1514 = vmatprep.subr.mxu0 0.0
        %1515 = vmatpush2.msra.mxu0 0.0
        %1516 = vmatprep.mubr.f32.mxu0 0.0
        %1517 = vmatmul.mubr.f32.gmra.mxu0 %v224
        %v1518 = vpop.f32.mrf.mxu0
        %v1519 = vadd.f32 0.0, %v1518
        %v1520 = vpop.f32.mrf.mxu0
        %1521 = vmatprep.mubr.f32.mxu0 0.0
        %1522 = vmatmul.mubr.f32.gmra.mxu0 %v227
        %v1523 = vpop.f32.mrf.mxu0
        %v1524 = vadd.f32 0.0, %v1523
        %v1525 = vpop.f32.mrf.mxu0
        %1526 = vdwg.mxu0
        %1528 = vrot.lane.b32.xlu0 %v1524, 127
        %v1529 = vpop.permute.xlu0 %1528
        %1531 = vrot.lane.b32.xlu0 %v1524, 15
        %v1532 = vpop.permute.xlu0 %1531
        %v1534 = vsel %vm311, %v1529, %v1532
        %v1535 = vadd.f32 %v1519, %v1534
        %v1537 = vsel %vm319, %v1535, 0
        %1539 = vmatprep.subr.mxu0 0.0
        %1540 = vmatpush1.msra.mxu0 0.0
        %1541 = vmatprep.subr.mxu0 0.0
        %1542 = vmatpush1.msra.mxu0 0.0
        %1543 = vmatprep.subr.mxu0 0.0
        %1544 = vmatpush1.msra.mxu0 0.0
        %1545 = vmatprep.subr.mxu0 0.0
        %1546 = vmatpush1.msra.mxu0 0.0
        %1547 = vmatprep.subr.mxu0 0.0
        %1548 = vmatpush1.msra.mxu0 0.0
        %1549 = vmatprep.subr.mxu0 0.0
        %1550 = vmatpush1.msra.mxu0 0.0
        %1551 = vmatprep.subr.mxu0 0.0
        %1552 = vmatpush1.msra.mxu0 0.0
        %1553 = vmatprep.subr.mxu0 0.0
        %1554 = vmatpush1.msra.mxu0 0.0
        %1555 = vmatprep.subr.mxu0 0.0
        %1556 = vmatpush1.msra.mxu0 0.0
        %1557 = vmatprep.subr.mxu0 0.0
        %1558 = vmatpush1.msra.mxu0 0.0
        %1559 = vmatprep.subr.mxu0 0.0
        %1560 = vmatpush1.msra.mxu0 0.0
        %1561 = vmatprep.subr.mxu0 0.0
        %1562 = vmatpush1.msra.mxu0 0.0
        %1563 = vmatprep.subr.mxu0 0.0
        %1564 = vmatpush1.msra.mxu0 0.0
        %1565 = vmatprep.subr.mxu0 0.0
        %1566 = vmatpush1.msra.mxu0 0.0
        %1567 = vmatprep.subr.mxu0 0.0
        %1568 = vmatpush1.msra.mxu0 %v213
        %1569 = vmatprep.subr.mxu0 0.0
        %1570 = vmatpush1.msra.mxu0 %v212
        %1571 = vmatprep.subr.mxu0 0.0
        %1572 = vmatpush2.msra.mxu0 0.0
        %1573 = vmatprep.subr.mxu0 0.0
        %1574 = vmatpush2.msra.mxu0 0.0
        %1575 = vmatprep.subr.mxu0 0.0
        %1576 = vmatpush2.msra.mxu0 0.0
        %1577 = vmatprep.subr.mxu0 0.0
        %1578 = vmatpush2.msra.mxu0 0.0
        %1579 = vmatprep.subr.mxu0 0.0
        %1580 = vmatpush2.msra.mxu0 0.0
        %1581 = vmatprep.subr.mxu0 0.0
        %1582 = vmatpush2.msra.mxu0 0.0
        %1583 = vmatprep.subr.mxu0 0.0
        %1584 = vmatpush2.msra.mxu0 0.0
        %1585 = vmatprep.subr.mxu0 0.0
        %1586 = vmatpush2.msra.mxu0 0.0
        %1587 = vmatprep.subr.mxu0 0.0
        %1588 = vmatpush2.msra.mxu0 0.0
        %1589 = vmatprep.subr.mxu0 0.0
        %1590 = vmatpush2.msra.mxu0 0.0
        %1591 = vmatprep.subr.mxu0 0.0
        %1592 = vmatpush2.msra.mxu0 0.0
        %1593 = vmatprep.subr.mxu0 0.0
        %1594 = vmatpush2.msra.mxu0 0.0
        %1595 = vmatprep.subr.mxu0 0.0
        %1596 = vmatpush2.msra.mxu0 0.0
        %1597 = vmatprep.subr.mxu0 0.0
        %1598 = vmatpush2.msra.mxu0 0.0
        %1599 = vmatprep.subr.mxu0 0.0
        %1600 = vmatpush2.msra.mxu0 0.0
        %1601 = vmatprep.subr.mxu0 0.0
        %1602 = vmatpush2.msra.mxu0 0.0
        %1603 = vmatprep.mubr.f32.mxu0 0.0
        %1604 = vmatmul.mubr.f32.gmra.mxu0 %v1537
        %v1605 = vpop.f32.mrf.mxu0
        %v1606 = vadd.f32 %v317, %v1605
        %v1607 = vpop.f32.mrf.mxu0
        %1608 = vdwg.mxu0
        %v1609 = vmax.f32 %v1606, 0.0
        %1611 = vrot.lane.b32.xlu0 %v1609, 56
        %v1612 = vpop.permute.xlu0 %1611
        %vm1614 = vcmask 523712
        %1615 = vst.msk [vmem:[%s188] sm:$0xff] %vm1614, %v1612
        %s1616 = sand.u32 %s109, 1
        %s1617 = scalar_lea.sflag [#allocation3], %s1616
        %s1618 = sand.u32 %s109, 1
        %s1619 = smul.addr %s1618, 8
        %s1620 = scalar_lea.vmem [#allocation2], %s1619
        // Predicated region
        $region33: #{tpu_custom_call.1} parent=31 // pred_check
          %p1621 = pneg %p119
        $region34: #{tpu_custom_call.1} parent=31 // pred_check_branch
          %1623 = sbr.rel (%p1621) target = $region36
        $region35: #{tpu_custom_call.1} parent=31 // pred_region
          %s1625 = ssub.s32 128, 128
          %1626 = vsyncadd %s1617, %s1625
          %s1627 = sadd.s32 %s22, %s21
          %s1628 = smul.addr %s1627, 128
          %s1629 = scalar_lea.hbm %s3, %s1628
          %s1631 = sshll.u32 %s1620, 4
          %s1632 = int_to_ptr.vmem [resolvable:$true] %s1631
          %1634 = dma.vmem_to_hbm [thread:$0]  %s1632, 128, %s1629, %s1617
        $region36: #{tpu_custom_call.1} parent=31 // pred_fallthru
          _
      $region32: #{tpu_custom_call.1} parent=5 // pred_fallthru
        _
      %p1635 = scmp.le.s32.totalorder 2, %s12
      // Predicated region
      $region37: #{tpu_custom_call.1} parent=5 // pred_check
        %p1636 = pneg %p1635
      $region38: #{tpu_custom_call.1} parent=5 // pred_check_branch
        %1638 = sbr.rel (%p1636) target = $region40
      $region39: #{tpu_custom_call.1} parent=5 // pred_region
        %s1639 = ssub.s32 %s12, 2
        // Predicated region
        $region41: #{tpu_custom_call.1} parent=39 // pred_check
          %p1640 = pneg %p125
        $region42: #{tpu_custom_call.1} parent=39 // pred_check_branch
          %1642 = sbr.rel (%p1640) target = $region44
        $region43: #{tpu_custom_call.1} parent=39 // pred_region
          %s1643 = sand.u32 %s110, 1
          %s1644 = scalar_lea.sflag [#allocation3], %s1643
          %s1645 = sand.u32 %s110, 1
          %s1646 = smul.addr %s1645, 8
          %s1647 = scalar_lea.vmem [#allocation2], %s1646
          %1648 = dma.done %s1644, 128
        $region44: #{tpu_custom_call.1} parent=39 // pred_fallthru
          _
      $region40: #{tpu_custom_call.1} parent=5 // pred_fallthru
        _
    $region6: #{tpu_custom_call.1} parent=1 // loop_footer
      %s16 = sadd.s32 1, %s12
    $region7: #{tpu_custom_call.1} parent=1 // loop_footer_branch
      %11 = sbr.rel target = $region3
    $region8: #{tpu_custom_call.1} parent=1 // loop_exit
      _
    %1649 = vsyncpa [#allocation3], 1
    %s1650 = scalar_lea.sflag [#allocation3], 1
    %1651 = vsyncpa %s1650, 1

</llo_original>
